<compile_context>
chip_gen: v6e
topology: v6e:2x2x1
jax: 0.10.0
libtpu: 0.0.40
codegen_flags: <defaults>
</compile_context>

<pallas_src>
from functools import partial

import numpy as np

import jax
import jax.numpy as jnp
from jax.experimental import pallas as pl
from jax.experimental.pallas import tpu as pltpu


# ----------------------------------------------------------------------------
# Cyclic shifts on the XLU; boundary rows are masked by the caller.
# ----------------------------------------------------------------------------
def _shift_down(x, k, axis):
    """result[i] = x[i - k]  (cyclic)."""
    return pltpu.roll(x, shift=k, axis=axis)


def _shift_up(x, k, axis):
    """result[i] = x[i + k]  (cyclic)."""
    n = x.shape[axis]
    return pltpu.roll(x, shift=(n - k) % n, axis=axis)


# ----------------------------------------------------------------------------
# Fused kernel: one grid step == B samples stacked along the matmul M axis.
# ----------------------------------------------------------------------------
def _make_kernel(B, H, W):
    LC = 8 * W          # lane width of conv activations (128 when W == 16)
    R = B * H           # batched matmul M dimension
    pow2_h = (H & (H - 1)) == 0

    def kernel(x_ref, w1_ref, b1_ref, w2_ref, b2_ref, wfc_ref, bfc_ref, out_ref):
        f32 = jnp.float32

        # Within-sample row index h = r % H, used to mask the cyclic row shifts
        # at the per-sample top/bottom conv-padding boundaries.
        r_idx = jax.lax.broadcasted_iota(jnp.int32, (R, 1), 0)
        if pow2_h:
            h_idx = jnp.bitwise_and(r_idx, H - 1)
        else:
            h_idx = jax.lax.rem(r_idx, H)

        # ---------------- Conv1: 1 -> 8, 3x3, pad=1, + ReLU ----------------
        # y1[r, 8w+c] = sum_{ky,kx} w1[ky,kx,c] * x_pad[r+ky-1, w+kx-1]
        # = ONE matmul against the row-stacked banded weights (48, 128).
        xs = x_ref[...]                                        # (R, W)
        x_m1 = jnp.where(h_idx > 0, _shift_down(xs, 1, 0), 0.0)      # row h-1
        x_p1 = jnp.where(h_idx < H - 1, _shift_up(xs, 1, 0), 0.0)    # row h+1
        lhs1 = jnp.concatenate([x_m1, xs, x_p1], axis=1)              # (R, 3W)
        y1 = jnp.dot(lhs1, w1_ref[...], preferred_element_type=f32)
        y1 = jnp.maximum(y1 + b1_ref[...], 0.0)                       # (R, LC)

        # ---------------- MaxPool 2x2 stride 2 (sparse layout) -------------
        # Valid pooled value pool[i, j, c] lands at [2i, 16j + c] (c < 8); all
        # other entries are finite junk killed by structurally-zero weights
        # downstream, so the cyclic wrap of these shifts never needs masking.
        m_rows = jnp.maximum(y1, _shift_up(y1, 1, 0))
        m_pool = jnp.maximum(m_rows, _shift_up(m_rows, 8, 1))

        # ---------------- Conv2: 8 -> 16, 3x3, pad=1, + ReLU ---------------
        # Runs directly on the sparse layout (valid outputs on even rows only);
        # junk lanes (ci >= 8) hit zero rows of the banded conv2 weights.
        p_m1 = jnp.where(h_idx >= 2, _shift_down(m_pool, 2, 0), 0.0)    # row i-1
        p_p1 = jnp.where(h_idx < H - 2, _shift_up(m_pool, 2, 0), 0.0)   # row i+1
        lhs2 = jnp.concatenate([p_m1, m_pool, p_p1], axis=1)            # (R, 3*LC)
        y2 = jnp.dot(lhs2, w2_ref[...], preferred_element_type=f32)
        y2 = jnp.maximum(y2 + b2_ref[...], 0.0)                          # (R, LC)

        # ------- Linear(16*(H/2)*(W/2) -> 1): VPU multiply + XLU reduce -----
        # wfc_ref has the FC weights scattered to [2i, 16j+co] with zeros at
        # the junk (odd) rows; no 1-lane MXU matmul.
        prod = y2.reshape(B, H, LC) * wfc_ref[...]          # (B, H, LC)
        lane_sum = jnp.sum(prod, axis=2, keepdims=True)     # (B, H, 1) lane reduce
        per = jnp.sum(lane_sum, axis=1, keepdims=True)      # (B, 1, 1) sublane reduce
        out_ref[...] = per + bfc_ref[...]

    return kernel


# ----------------------------------------------------------------------------
# One-time lowering of PyTorch-layout parameters to the kernel's structured
# (row-stacked, banded) weight matrices.  Pure XLA on tiny tensors.
# ----------------------------------------------------------------------------
def lower_params(params, h, w):
    assert h % 2 == 0 and w % 2 == 0
    hp, wp = h // 2, w // 2
    lc = 8 * w                                       # == 16 * wp

    w1 = jnp.transpose(params["w1"], (2, 3, 1, 0))   # OIHW -> HWIO (3,3,1,8)
    w2 = jnp.transpose(params["w2"], (2, 3, 1, 0))   # OIHW -> HWIO (3,3,8,16)

    # Conv1 banded weights, stacked over ky: row ky*W + p, col 8*w + c.
    s1 = np.zeros((3, w, w), np.float32)
    for kx in range(3):
        for ww in range(w):
            p = ww + kx - 1
            if 0 <= p < w:
                s1[kx, p, ww] = 1.0
    w1s = jnp.einsum("xpw,yxc->ypwc", jnp.asarray(s1),
                     w1[:, :, 0, :]).reshape(3 * w, lc)
    b1r = jnp.tile(params["b1"], w).reshape(1, lc)

    # Conv2 banded weights, stacked over ky: row ky*LC + 16*jj + ci
    # (ci >= 8 rows are zero -> junk pool lanes ignored), col 16*j + co.
    s2 = np.zeros((3, wp, wp), np.float32)
    for kx in range(3):
        for j in range(wp):
            jj = j + kx - 1
            if 0 <= jj < wp:
                s2[kx, jj, j] = 1.0
    t2 = jnp.einsum("xaj,yxcd->yacjd", jnp.asarray(s2), w2)     # (3,wp,8,wp,16)
    t2 = jnp.pad(t2, ((0, 0), (0, 0), (0, 8), (0, 0), (0, 0)))   # ci -> 16 slots
    w2s = t2.reshape(3 * lc, lc)
    b2r = jnp.tile(params["b2"], wp).reshape(1, lc)

    # FC weights: flatten index co*hp*wp + i*wp + j  ->  [2*i, 16*j + co],
    # zeros at odd rows (the junk rows of the sparse conv2 output).
    wfc = params["wfc"].reshape(16, hp, wp)
    wfc = jnp.transpose(wfc, (1, 2, 0)).reshape(hp, lc)
    wfc_k = jnp.stack([wfc, jnp.zeros_like(wfc)], axis=1).reshape(h, lc)
    bfc = params["bfc"].reshape(1, 1)

    return {"w1s": w1s, "b1r": b1r, "w2s": w2s, "b2r": b2r,
            "wfc_k": wfc_k, "bfc": bfc}


# ----------------------------------------------------------------------------
# Forward: single fused pallas_call, B samples per grid step, batch-parallel.
# ----------------------------------------------------------------------------
@partial(jax.jit, static_argnames=("block_b",))
def foam_predictor_forward(x_nchw, lp, block_b=16):
    N, cin, H, W = x_nchw.shape
    assert cin == 1
    assert H % 8 == 0 and W % 2 == 0
    LC = 8 * W
    # Lane-dense activations: every conv matmul result row is whole 128-lane
    # vregs only when 8*W is a multiple of 128 (W = 16 here).
    assert LC % 128 == 0, "8*W must be a multiple of 128 (e.g. W == 16)"

    B = min(block_b, N)                      # samples per grid step
    G = pl.cdiv(N, B)                        # grid length (>= 2 keeps both v7x TCs busy)
    Np = G * B
    x = x_nchw.reshape(N, H, W).astype(jnp.float32)
    if Np != N:                              # pad batch to a multiple of B
        x = jnp.concatenate([x, jnp.zeros((Np - N, H, W), jnp.float32)], axis=0)
    x_rows = x.reshape(Np * H, W)            # row r = sample*H + h (sample-major)

    kernel = _make_kernel(B, H, W)
    out = pl.pallas_call(
        kernel,
        out_shape=jax.ShapeDtypeStruct((Np, 1, 1), jnp.float32),
        grid=(G,),
        in_specs=[
            pl.BlockSpec((B * H, W), lambda i: (i, 0)),      # B stacked images
            pl.BlockSpec((3 * W, LC), lambda i: (0, 0)),     # conv1 banded W (ky-stacked)
            pl.BlockSpec((1, LC), lambda i: (0, 0)),         # conv1 bias row
            pl.BlockSpec((3 * LC, LC), lambda i: (0, 0)),    # conv2 banded W (ky-stacked)
            pl.BlockSpec((1, LC), lambda i: (0, 0)),         # conv2 bias row
            pl.BlockSpec((H, LC), lambda i: (0, 0)),         # FC weights (zeroed odd rows)
            pl.BlockSpec((1, 1), lambda i: (0, 0)),          # FC bias
        ],
        out_specs=pl.BlockSpec((B, 1, 1), lambda i: (i, 0, 0)),   # B outputs / step
        compiler_params=pltpu.CompilerParams(
            dimension_semantics=("parallel",)),              # megacore / both v7x TCs
    )(x_rows, lp["w1s"], lp["b1r"], lp["w2s"], lp["b2r"], lp["wfc_k"], lp["bfc"])
    return out.reshape(Np, 1)[:N]


# ----------------------------------------------------------------------------
# Parameters in PyTorch layout + pure-JAX reference (ground truth, HIGHEST).
# ----------------------------------------------------------------------------
def init_params(key, h, w):
    k1, k2, k3, k4, k5, k6 = jax.random.split(key, 6)
    return {
        "w1": 0.1 * jax.random.normal(k1, (8, 1, 3, 3), jnp.float32),    # OIHW
        "b1": 0.1 * jax.random.normal(k2, (8,), jnp.float32),
        "w2": 0.1 * jax.random.normal(k3, (16, 8, 3, 3), jnp.float32),   # OIHW
        "b2": 0.1 * jax.random.normal(k4, (16,), jnp.float32),
        "wfc": 0.1 * jax.random.normal(
            k5, (1, 16 * (h // 2) * (w // 2)), jnp.float32),             # (out,in)
        "bfc": 0.1 * jax.random.normal(k6, (1,), jnp.float32),
    }


def reference_forward(x_nchw, params):
    dn = ("NCHW", "OIHW", "NCHW")
    hi = jax.lax.Precision.HIGHEST
    y = jax.lax.conv_general_dilated(
        x_nchw, params["w1"], (1, 1), "SAME", dimension_numbers=dn, precision=hi
    ) + params["b1"][None, :, None, None]
    y = jnp.maximum(y, 0.0)
    y = jax.lax.reduce_window(
        y, -jnp.inf, jax.lax.max, (1, 1, 2, 2), (1, 1, 2, 2), "VALID")
    y = jax.lax.conv_general_dilated(
        y, params["w2"], (1, 1), "SAME", dimension_numbers=dn, precision=hi
    ) + params["b2"][None, :, None, None]
    y = jnp.maximum(y, 0.0)
    y = y.reshape(y.shape[0], -1)              # PyTorch (c, h, w) flatten order
    return jnp.dot(y, params["wfc"].T, precision=hi) + params["bfc"]


# ----------------------------------------------------------------------------
if __name__ == "__main__":
    key = jax.random.PRNGKey(0)
    kx_, kp_ = jax.random.split(key)

    N, H, W = 32, 16, 16                       # input_shape = (16, 16), C_in = 1
    x = jax.random.normal(kx_, (N, 1, H, W), jnp.float32)   # NCHW like PyTorch
    params = init_params(kp_, H, W)
    lp = lower_params(params, H, W)            # one-time weight lowering

    out = foam_predictor_forward(x, lp, block_b=16)   # grid=(2,), M=256 per step
    out = jax.block_until_ready(out)
    assert out.shape == (N, 1), out.shape

    ref = reference_forward(x, params)
    # Kernel matmuls run at default MXU precision (the production setting)
    # while the reference uses Precision.HIGHEST; allow for bf16-pass error
    # accumulated through the 1024-term FC reduction across the batch.
    assert jnp.allclose(out, ref, atol=2e-2, rtol=2e-2), (
        float(jnp.max(jnp.abs(out - ref))))

    print("KERNEL_OK")
</pallas_src>

<mosaic_0001>
module attributes {stable_mosaic.version = 11 : i64} {
  func.func @kernel(%arg0: i32, %arg1: memref<256x16xf32, #tpu.memory_space<vmem>>, %arg2: memref<48x128xf32, #tpu.memory_space<vmem>>, %arg3: memref<1x128xf32, #tpu.memory_space<vmem>>, %arg4: memref<384x128xf32, #tpu.memory_space<vmem>>, %arg5: memref<1x128xf32, #tpu.memory_space<vmem>>, %arg6: memref<16x128xf32, #tpu.memory_space<vmem>>, %arg7: memref<1x1xf32, #tpu.memory_space<vmem>>, %arg8: memref<16x1x1xf32, #tpu.memory_space<vmem>>) attributes {dimension_semantics = [#tpu.dimension_semantics<parallel>], iteration_bounds = array<i64: 2>, scalar_prefetch = 0 : i64, scratch_operands = 0 : i64, tpu.core_type = #tpu.core_type<tc>, window_params = [{transform_indices = @transform_0, window_bounds = array<i64: 256, 16>}, {pipeline_mode = #tpu.pipeline_mode<synchronous>, transform_indices = @transform_1, window_bounds = array<i64: 48, 128>}, {pipeline_mode = #tpu.pipeline_mode<synchronous>, transform_indices = @transform_2, window_bounds = array<i64: 1, 128>}, {pipeline_mode = #tpu.pipeline_mode<synchronous>, transform_indices = @transform_3, window_bounds = array<i64: 384, 128>}, {pipeline_mode = #tpu.pipeline_mode<synchronous>, transform_indices = @transform_4, window_bounds = array<i64: 1, 128>}, {pipeline_mode = #tpu.pipeline_mode<synchronous>, transform_indices = @transform_5, window_bounds = array<i64: 16, 128>}, {pipeline_mode = #tpu.pipeline_mode<synchronous>, transform_indices = @transform_6, window_bounds = array<i64: 1, 1>}, {transform_indices = @transform_7, window_bounds = array<i64: 16, 1, 1>}]} {
    %0 = tpu.iota {dimensions = array<i32: 0>} : vector<256x1xi32>
    %c15_i32 = arith.constant 15 : i32
    %1 = vector.broadcast %c15_i32 : i32 to vector<256x1xi32>
    %2 = arith.andi %0, %1 : vector<256x1xi32>
    %c0 = arith.constant 0 : index
    %c0_0 = arith.constant 0 : index
    %3 = vector.load %arg1[%c0, %c0_0] : memref<256x16xf32, #tpu.memory_space<vmem>>, vector<256x16xf32>
    %c0_i32 = arith.constant 0 : i32
    %4 = vector.broadcast %c0_i32 : i32 to vector<256x1xi32>
    %5 = arith.cmpi sgt, %2, %4 : vector<256x1xi32>
    %c1_i32 = arith.constant 1 : i32
    %6 = tpu.dynamic_rotate %3 by %c1_i32 dim 0 : vector<256x16xf32>, i32 -> vector<256x16xf32>
    %cst = arith.constant 0.000000e+00 : f32
    %7 = vector.shape_cast %5 : vector<256x1xi1> to vector<256x1xi1>
    %8 = vector.broadcast %7 : vector<256x1xi1> to vector<256x16xi1>
    %9 = vector.broadcast %cst : f32 to vector<256x16xf32>
    %10 = arith.select %8, %6, %9 : vector<256x16xi1>, vector<256x16xf32>
    %c15_i32_1 = arith.constant 15 : i32
    %11 = vector.broadcast %c15_i32_1 : i32 to vector<256x1xi32>
    %12 = arith.cmpi slt, %2, %11 : vector<256x1xi32>
    %c255_i32 = arith.constant 255 : i32
    %13 = tpu.dynamic_rotate %3 by %c255_i32 dim 0 : vector<256x16xf32>, i32 -> vector<256x16xf32>
    %cst_2 = arith.constant 0.000000e+00 : f32
    %14 = vector.shape_cast %12 : vector<256x1xi1> to vector<256x1xi1>
    %15 = vector.broadcast %14 : vector<256x1xi1> to vector<256x16xi1>
    %16 = vector.broadcast %cst_2 : f32 to vector<256x16xf32>
    %17 = arith.select %15, %13, %16 : vector<256x16xi1>, vector<256x16xf32>
    %18 = tpu.concatenate %10, %3, %17 in 1 : vector<256x16xf32>, vector<256x16xf32>, vector<256x16xf32> -> vector<256x48xf32>
    %c0_3 = arith.constant 0 : index
    %c0_4 = arith.constant 0 : index
    %19 = vector.load %arg2[%c0_3, %c0_4] : memref<48x128xf32, #tpu.memory_space<vmem>>, vector<48x128xf32>
    %cst_5 = arith.constant dense<0.000000e+00> : vector<256x128xf32>
    %20 = tpu.matmul %18, %19, %cst_5 {dimension_numbers = #tpu.dot_dimension_numbers<[1], [0], [0], [1], [0, 0, 1, 1], [], []>} : vector<256x48xf32>, vector<48x128xf32>, vector<256x128xf32> -> vector<256x128xf32>
    %c0_6 = arith.constant 0 : index
    %c0_7 = arith.constant 0 : index
    %21 = vector.load %arg3[%c0_6, %c0_7] : memref<1x128xf32, #tpu.memory_space<vmem>>, vector<1x128xf32>
    %22 = vector.broadcast %21 : vector<1x128xf32> to vector<256x128xf32>
    %23 = arith.addf %20, %22 : vector<256x128xf32>
    %cst_8 = arith.constant 0.000000e+00 : f32
    %24 = vector.broadcast %cst_8 : f32 to vector<256x128xf32>
    %25 = arith.maximumf %23, %24 : vector<256x128xf32>
    %c255_i32_9 = arith.constant 255 : i32
    %26 = tpu.dynamic_rotate %25 by %c255_i32_9 dim 0 : vector<256x128xf32>, i32 -> vector<256x128xf32>
    %27 = arith.maximumf %25, %26 : vector<256x128xf32>
    %c120_i32 = arith.constant 120 : i32
    %28 = tpu.dynamic_rotate %27 by %c120_i32 dim 1 : vector<256x128xf32>, i32 -> vector<256x128xf32>
    %29 = arith.maximumf %27, %28 : vector<256x128xf32>
    %c2_i32 = arith.constant 2 : i32
    %30 = vector.broadcast %c2_i32 : i32 to vector<256x1xi32>
    %31 = arith.cmpi sge, %2, %30 : vector<256x1xi32>
    %c2_i32_10 = arith.constant 2 : i32
    %32 = tpu.dynamic_rotate %29 by %c2_i32_10 dim 0 : vector<256x128xf32>, i32 -> vector<256x128xf32>
    %cst_11 = arith.constant 0.000000e+00 : f32
    %33 = vector.shape_cast %31 : vector<256x1xi1> to vector<256x1xi1>
    %34 = vector.broadcast %33 : vector<256x1xi1> to vector<256x128xi1>
    %35 = vector.broadcast %cst_11 : f32 to vector<256x128xf32>
    %36 = arith.select %34, %32, %35 : vector<256x128xi1>, vector<256x128xf32>
    %c14_i32 = arith.constant 14 : i32
    %37 = vector.broadcast %c14_i32 : i32 to vector<256x1xi32>
    %38 = arith.cmpi slt, %2, %37 : vector<256x1xi32>
    %c254_i32 = arith.constant 254 : i32
    %39 = tpu.dynamic_rotate %29 by %c254_i32 dim 0 : vector<256x128xf32>, i32 -> vector<256x128xf32>
    %cst_12 = arith.constant 0.000000e+00 : f32
    %40 = vector.shape_cast %38 : vector<256x1xi1> to vector<256x1xi1>
    %41 = vector.broadcast %40 : vector<256x1xi1> to vector<256x128xi1>
    %42 = vector.broadcast %cst_12 : f32 to vector<256x128xf32>
    %43 = arith.select %41, %39, %42 : vector<256x128xi1>, vector<256x128xf32>
    %44 = tpu.concatenate %36, %29, %43 in 1 : vector<256x128xf32>, vector<256x128xf32>, vector<256x128xf32> -> vector<256x384xf32>
    %c0_13 = arith.constant 0 : index
    %c0_14 = arith.constant 0 : index
    %45 = vector.load %arg4[%c0_13, %c0_14] : memref<384x128xf32, #tpu.memory_space<vmem>>, vector<384x128xf32>
    %cst_15 = arith.constant dense<0.000000e+00> : vector<256x128xf32>
    %46 = tpu.matmul %44, %45, %cst_15 {dimension_numbers = #tpu.dot_dimension_numbers<[1], [0], [0], [1], [0, 0, 1, 1], [], []>} : vector<256x384xf32>, vector<384x128xf32>, vector<256x128xf32> -> vector<256x128xf32>
    %c0_16 = arith.constant 0 : index
    %c0_17 = arith.constant 0 : index
    %47 = vector.load %arg5[%c0_16, %c0_17] : memref<1x128xf32, #tpu.memory_space<vmem>>, vector<1x128xf32>
    %48 = vector.broadcast %47 : vector<1x128xf32> to vector<256x128xf32>
    %49 = arith.addf %46, %48 : vector<256x128xf32>
    %cst_18 = arith.constant 0.000000e+00 : f32
    %50 = vector.broadcast %cst_18 : f32 to vector<256x128xf32>
    %51 = arith.maximumf %49, %50 : vector<256x128xf32>
    %52 = vector.shape_cast %51 : vector<256x128xf32> to vector<16x16x128xf32>
    %c0_19 = arith.constant 0 : index
    %c0_20 = arith.constant 0 : index
    %53 = vector.load %arg6[%c0_19, %c0_20] : memref<16x128xf32, #tpu.memory_space<vmem>>, vector<16x128xf32>
    %54 = vector.shape_cast %53 : vector<16x128xf32> to vector<1x16x128xf32>
    %55 = vector.broadcast %54 : vector<1x16x128xf32> to vector<16x16x128xf32>
    %56 = arith.mulf %52, %55 : vector<16x16x128xf32>
    %cst_21 = arith.constant dense<0.000000e+00> : vector<16x16xf32>
    %57 = vector.multi_reduction <add>, %56, %cst_21 [2] : vector<16x16x128xf32> to vector<16x16xf32>
    %58 = vector.shape_cast %57 : vector<16x16xf32> to vector<16x16x1xf32>
    %cst_22 = arith.constant dense<0.000000e+00> : vector<16x1xf32>
    %59 = vector.multi_reduction <add>, %58, %cst_22 [1] : vector<16x16x1xf32> to vector<16x1xf32>
    %60 = vector.shape_cast %59 : vector<16x1xf32> to vector<16x1x1xf32>
    %c0_23 = arith.constant 0 : index
    %c0_24 = arith.constant 0 : index
    %61 = vector.load %arg7[%c0_23, %c0_24] : memref<1x1xf32, #tpu.memory_space<vmem>>, vector<1x1xf32>
    %62 = vector.shape_cast %61 : vector<1x1xf32> to vector<1x1x1xf32>
    %63 = vector.broadcast %62 : vector<1x1x1xf32> to vector<16x1x1xf32>
    %64 = arith.addf %60, %63 : vector<16x1x1xf32>
    %c0_25 = arith.constant 0 : index
    %c0_26 = arith.constant 0 : index
    %c0_27 = arith.constant 0 : index
    %65 = vector.load %arg8[%c0_25, %c0_26, %c0_27] : memref<16x1x1xf32, #tpu.memory_space<vmem>>, vector<16x1x1xf32>
    tpu.vector_store %arg8[%c0_25, %c0_26, %c0_27], %64 {strides = array<i32>} : memref<16x1x1xf32, #tpu.memory_space<vmem>>, vector<16x1x1xf32>,
    return
  }
  func.func @transform_0(%arg0: i32) -> (i32, i32) {
    %c0_i32 = arith.constant 0 : i32
    %c0_i32_0 = arith.constant 0 : i32
    return %arg0, %c0_i32 : i32, i32
  }
  func.func @transform_1(%arg0: i32) -> (i32, i32) {
    %c0_i32 = arith.constant 0 : i32
    %c0_i32_0 = arith.constant 0 : i32
    %c0_i32_1 = arith.constant 0 : i32
    return %c0_i32, %c0_i32_0 : i32, i32
  }
  func.func @transform_2(%arg0: i32) -> (i32, i32) {
    %c0_i32 = arith.constant 0 : i32
    %c0_i32_0 = arith.constant 0 : i32
    %c0_i32_1 = arith.constant 0 : i32
    return %c0_i32, %c0_i32_0 : i32, i32
  }
  func.func @transform_3(%arg0: i32) -> (i32, i32) {
    %c0_i32 = arith.constant 0 : i32
    %c0_i32_0 = arith.constant 0 : i32
    %c0_i32_1 = arith.constant 0 : i32
    return %c0_i32, %c0_i32_0 : i32, i32
  }
  func.func @transform_4(%arg0: i32) -> (i32, i32) {
    %c0_i32 = arith.constant 0 : i32
    %c0_i32_0 = arith.constant 0 : i32
    %c0_i32_1 = arith.constant 0 : i32
    return %c0_i32, %c0_i32_0 : i32, i32
  }
  func.func @transform_5(%arg0: i32) -> (i32, i32) {
    %c0_i32 = arith.constant 0 : i32
    %c0_i32_0 = arith.constant 0 : i32
    %c0_i32_1 = arith.constant 0 : i32
    return %c0_i32, %c0_i32_0 : i32, i32
  }
  func.func @transform_6(%arg0: i32) -> (i32, i32) {
    %c0_i32 = arith.constant 0 : i32
    %c0_i32_0 = arith.constant 0 : i32
    %c0_i32_1 = arith.constant 0 : i32
    return %c0_i32, %c0_i32_0 : i32, i32
  }
  func.func @transform_7(%arg0: i32) -> (i32, i32, i32) {
    %c0_i32 = arith.constant 0 : i32
    %c0_i32_0 = arith.constant 0 : i32
    %c0_i32_1 = arith.constant 0 : i32
    return %arg0, %c0_i32, %c0_i32_0 : i32, i32, i32
  }
}

</mosaic_0001>

<llo_original>
// kernel: foam_predictor_forward.1
$region0: #{foam_predictor_forward.1}
  #allocation0 [shape = 'u32[]', space=smem, size = 0x4, offset = 0x4, fixed_abs, tag = 'smem constant byte address 0x4 - core index']
  #allocation1 [shape = 'u32[144,128]{1,0:T(1,128)}', space=vmem, size = 0x12000, scoped, tag = 'internal scratch']
  #allocation2 [shape = 'f32[1,1]{1,0:T(1,128)S(1)}', space=vmem, size = 0x200, scoped, tag = 'scoped memory for foam_predictor_forward.1']
  %s0 = inlined_call_operand.vmem [shape: f32[512,16], index: 0, kind: input, shape index: {}]
  %s1 = inlined_call_operand.vmem [shape: f32[48,128], index: 1, kind: input, shape index: {}]
  %s2 = inlined_call_operand.vmem [shape: f32[1,128], index: 2, kind: input, shape index: {}]
  %s3 = inlined_call_operand.vmem [shape: f32[384,128], index: 3, kind: input, shape index: {}]
  %s4 = inlined_call_operand.vmem [shape: f32[1,128], index: 4, kind: input, shape index: {}]
  %s5 = inlined_call_operand.vmem [shape: f32[16,128], index: 5, kind: input, shape index: {}]
  %s6 = inlined_call_operand.<no memory space> [shape: f32[1,1], index: 6, kind: input, shape index: {}]
  %s7 = inlined_call_operand.vmem [shape: f32[32,1,1], index: 7, kind: output, shape index: {}]
  %s8 = sld [smem:[#allocation0]]
  $region61: #{foam_predictor_forward.1} parent=0
    _
  %s10 = ssub.s32 1, %s8
  %s11 = scalar_select 0, %s10, %s8
  %v12 = vstv %s6
  %13 = vst [vmem:[#allocation2] sm:$0x1] %v12
  loop: start=0, step=1, limit=4
  $region2: #{foam_predictor_forward.1} parent=0 // loop_pre_header
    _
  $region3: #{foam_predictor_forward.1} parent=0 // loop_header
    %s15 = sphi 0, %s19
    %p16 = scmp.ge.s32.totalorder %s15, 4
    %s25 = sphi 0, %s27
    %s28 = sphi 0, %s25
    %s29 = sphi 0, %s28
    %s45 = sphi 0, %s29
    %s49 = sphi 0, %s49
    %s51 = sphi 0, %s49
    %s52 = sphi 0, %s51
    %s66 = sphi 0, %s52
    %s70 = sphi 0, %s70
    %s72 = sphi 0, %s70
    %s73 = sphi 0, %s72
    %s87 = sphi 0, %s73
    %s91 = sphi 0, %s91
    %s93 = sphi 0, %s91
    %s94 = sphi 0, %s93
    %s108 = sphi 0, %s94
    %s112 = sphi 0, %s112
    %s114 = sphi 0, %s112
    %s115 = sphi 0, %s114
    %s129 = sphi 0, %s115
    %s133 = sphi 0, %s133
    %s135 = sphi 0, %s133
    %s136 = sphi 0, %s135
    %s150 = sphi 0, %s136
    %s154 = sphi 0, %s154
    %s156 = sphi 0, %s154
    %s157 = sphi 0, %s156
    %s171 = sphi 0, %s157
    %s177 = sphi 0, %s179
    %s180 = sphi 0, %s177
    %s181 = sphi 0, %s180
    %s197 = sphi 0, %s181
  $region4: #{foam_predictor_forward.1} parent=0 // loop_header_branch
    %18 = sbr.rel (%p16) target = $region8
  $region5: #{foam_predictor_forward.1} parent=0 // loop_body
    %s20 = ssub.s32 %s15, 1
    %s21 = ssub.s32 %s15, 2
    %s22 = sadd.s32 %s15, 1
    %s23 = ssub.s32 %s15, %s22
    %p24 = scmp.eq.s32.totalorder %s23, 0
    %s26 = sadd.s32 %s25, 1
    %s27 = scalar_select %p24, %s25, %s26
    %p30 = pneg %p24
    %p31 = scmp.eq.s32.totalorder %s15, 1
    %p32 = por %p30, %p31
    %p33 = scmp.ne.s32.totalorder %s25, %s28
    %p34 = scmp.eq.s32.totalorder %s15, 0
    %p35 = por %p33, %p34
    %p36 = scmp.ne.s32.totalorder %s25, %s28
    %p37 = scmp.eq.s32.totalorder %s20, 1
    %p38 = por %p36, %p37
    %p39 = scmp.ne.s32.totalorder %s28, %s29
    %p40 = scmp.eq.s32.totalorder %s20, 0
    %p41 = por %p39, %p40
    %p42 = scmp.ne.s32.totalorder %s28, %s29
    %p43 = scmp.eq.s32.totalorder %s21, 1
    %p44 = por %p42, %p43
    %p46 = scmp.ne.s32.totalorder %s29, %s45
    %p47 = scmp.eq.s32.totalorder %s21, 0
    %p48 = por %p46, %p47
    %s50 = sadd.s32 %s49, 1
    %p53 = scmp.eq.s32.totalorder %s15, 1
    %p54 = scmp.ne.s32.totalorder %s49, %s51
    %p55 = scmp.eq.s32.totalorder %s15, 0
    %p56 = por %p54, %p55
    %p57 = scmp.ne.s32.totalorder %s49, %s51
    %p58 = scmp.eq.s32.totalorder %s20, 1
    %p59 = por %p57, %p58
    %p60 = scmp.ne.s32.totalorder %s51, %s52
    %p61 = scmp.eq.s32.totalorder %s20, 0
    %p62 = por %p60, %p61
    %p63 = scmp.ne.s32.totalorder %s51, %s52
    %p64 = scmp.eq.s32.totalorder %s21, 1
    %p65 = por %p63, %p64
    %p67 = scmp.ne.s32.totalorder %s52, %s66
    %p68 = scmp.eq.s32.totalorder %s21, 0
    %p69 = por %p67, %p68
    %s71 = sadd.s32 %s70, 1
    %p74 = scmp.eq.s32.totalorder %s15, 1
    %p75 = scmp.ne.s32.totalorder %s70, %s72
    %p76 = scmp.eq.s32.totalorder %s15, 0
    %p77 = por %p75, %p76
    %p78 = scmp.ne.s32.totalorder %s70, %s72
    %p79 = scmp.eq.s32.totalorder %s20, 1
    %p80 = por %p78, %p79
    %p81 = scmp.ne.s32.totalorder %s72, %s73
    %p82 = scmp.eq.s32.totalorder %s20, 0
    %p83 = por %p81, %p82
    %p84 = scmp.ne.s32.totalorder %s72, %s73
    %p85 = scmp.eq.s32.totalorder %s21, 1
    %p86 = por %p84, %p85
    %p88 = scmp.ne.s32.totalorder %s73, %s87
    %p89 = scmp.eq.s32.totalorder %s21, 0
    %p90 = por %p88, %p89
    %s92 = sadd.s32 %s91, 1
    %p95 = scmp.eq.s32.totalorder %s15, 1
    %p96 = scmp.ne.s32.totalorder %s91, %s93
    %p97 = scmp.eq.s32.totalorder %s15, 0
    %p98 = por %p96, %p97
    %p99 = scmp.ne.s32.totalorder %s91, %s93
    %p100 = scmp.eq.s32.totalorder %s20, 1
    %p101 = por %p99, %p100
    %p102 = scmp.ne.s32.totalorder %s93, %s94
    %p103 = scmp.eq.s32.totalorder %s20, 0
    %p104 = por %p102, %p103
    %p105 = scmp.ne.s32.totalorder %s93, %s94
    %p106 = scmp.eq.s32.totalorder %s21, 1
    %p107 = por %p105, %p106
    %p109 = scmp.ne.s32.totalorder %s94, %s108
    %p110 = scmp.eq.s32.totalorder %s21, 0
    %p111 = por %p109, %p110
    %s113 = sadd.s32 %s112, 1
    %p116 = scmp.eq.s32.totalorder %s15, 1
    %p117 = scmp.ne.s32.totalorder %s112, %s114
    %p118 = scmp.eq.s32.totalorder %s15, 0
    %p119 = por %p117, %p118
    %p120 = scmp.ne.s32.totalorder %s112, %s114
    %p121 = scmp.eq.s32.totalorder %s20, 1
    %p122 = por %p120, %p121
    %p123 = scmp.ne.s32.totalorder %s114, %s115
    %p124 = scmp.eq.s32.totalorder %s20, 0
    %p125 = por %p123, %p124
    %p126 = scmp.ne.s32.totalorder %s114, %s115
    %p127 = scmp.eq.s32.totalorder %s21, 1
    %p128 = por %p126, %p127
    %p130 = scmp.ne.s32.totalorder %s115, %s129
    %p131 = scmp.eq.s32.totalorder %s21, 0
    %p132 = por %p130, %p131
    %s134 = sadd.s32 %s133, 1
    %p137 = scmp.eq.s32.totalorder %s15, 1
    %p138 = scmp.ne.s32.totalorder %s133, %s135
    %p139 = scmp.eq.s32.totalorder %s15, 0
    %p140 = por %p138, %p139
    %p141 = scmp.ne.s32.totalorder %s133, %s135
    %p142 = scmp.eq.s32.totalorder %s20, 1
    %p143 = por %p141, %p142
    %p144 = scmp.ne.s32.totalorder %s135, %s136
    %p145 = scmp.eq.s32.totalorder %s20, 0
    %p146 = por %p144, %p145
    %p147 = scmp.ne.s32.totalorder %s135, %s136
    %p148 = scmp.eq.s32.totalorder %s21, 1
    %p149 = por %p147, %p148
    %p151 = scmp.ne.s32.totalorder %s136, %s150
    %p152 = scmp.eq.s32.totalorder %s21, 0
    %p153 = por %p151, %p152
    %s155 = sadd.s32 %s154, 1
    %p158 = scmp.eq.s32.totalorder %s15, 1
    %p159 = scmp.ne.s32.totalorder %s154, %s156
    %p160 = scmp.eq.s32.totalorder %s15, 0
    %p161 = por %p159, %p160
    %p162 = scmp.ne.s32.totalorder %s154, %s156
    %p163 = scmp.eq.s32.totalorder %s20, 1
    %p164 = por %p162, %p163
    %p165 = scmp.ne.s32.totalorder %s156, %s157
    %p166 = scmp.eq.s32.totalorder %s20, 0
    %p167 = por %p165, %p166
    %p168 = scmp.ne.s32.totalorder %s156, %s157
    %p169 = scmp.eq.s32.totalorder %s21, 1
    %p170 = por %p168, %p169
    %p172 = scmp.ne.s32.totalorder %s157, %s171
    %p173 = scmp.eq.s32.totalorder %s21, 0
    %p174 = por %p172, %p173
    %s175 = ssub.s32 %s15, %s22
    %p176 = scmp.eq.s32.totalorder %s175, 0
    %s178 = sadd.s32 %s177, 1
    %s179 = scalar_select %p176, %s177, %s178
    %p182 = pneg %p176
    %p183 = scmp.eq.s32.totalorder %s15, 1
    %p184 = por %p182, %p183
    %p185 = scmp.ne.s32.totalorder %s177, %s180
    %p186 = scmp.eq.s32.totalorder %s15, 0
    %p187 = por %p185, %p186
    %p188 = scmp.ne.s32.totalorder %s177, %s180
    %p189 = scmp.eq.s32.totalorder %s20, 1
    %p190 = por %p188, %p189
    %p191 = scmp.ne.s32.totalorder %s180, %s181
    %p192 = scmp.eq.s32.totalorder %s20, 0
    %p193 = por %p191, %p192
    %p194 = scmp.ne.s32.totalorder %s180, %s181
    %p195 = scmp.eq.s32.totalorder %s21, 1
    %p196 = por %p194, %p195
    %p198 = scmp.ne.s32.totalorder %s181, %s197
    %p199 = scmp.eq.s32.totalorder %s21, 0
    %p200 = por %p198, %p199
    %p201 = scmp.le.s32.totalorder 1, %s15
    %p202 = scmp.lt.s32.totalorder %s15, 3
    %p203 = pnand %p201, %p202
    %p204 = pneg %p203
    // Predicated region
    $region9: #{foam_predictor_forward.1} parent=5 // pred_check
      _
    $region10: #{foam_predictor_forward.1} parent=5 // pred_check_branch
      %206 = sbr.rel (%p203) target = $region12
    $region11: #{foam_predictor_forward.1} parent=5 // pred_region
      %s207 = ssub.s32 %s15, 1
      // Predicated region
      $region13: #{foam_predictor_forward.1} parent=11 // pred_check
        %p208 = pneg %p62
      $region14: #{foam_predictor_forward.1} parent=11 // pred_check_branch
        %210 = sbr.rel (%p208) target = $region16
      $region15: #{foam_predictor_forward.1} parent=11 // pred_region
        _
      $region16: #{foam_predictor_forward.1} parent=11 // pred_fallthru
        _
      // Predicated region
      $region17: #{foam_predictor_forward.1} parent=11 // pred_check
        %p211 = pneg %p83
      $region18: #{foam_predictor_forward.1} parent=11 // pred_check_branch
        %213 = sbr.rel (%p211) target = $region20
      $region19: #{foam_predictor_forward.1} parent=11 // pred_region
        _
      $region20: #{foam_predictor_forward.1} parent=11 // pred_fallthru
        _
      // Predicated region
      $region21: #{foam_predictor_forward.1} parent=11 // pred_check
        %p214 = pneg %p104
      $region22: #{foam_predictor_forward.1} parent=11 // pred_check_branch
        %216 = sbr.rel (%p214) target = $region24
      $region23: #{foam_predictor_forward.1} parent=11 // pred_region
        _
      $region24: #{foam_predictor_forward.1} parent=11 // pred_fallthru
        _
      // Predicated region
      $region25: #{foam_predictor_forward.1} parent=11 // pred_check
        %p217 = pneg %p125
      $region26: #{foam_predictor_forward.1} parent=11 // pred_check_branch
        %219 = sbr.rel (%p217) target = $region28
      $region27: #{foam_predictor_forward.1} parent=11 // pred_region
        _
      $region28: #{foam_predictor_forward.1} parent=11 // pred_fallthru
        _
      // Predicated region
      $region29: #{foam_predictor_forward.1} parent=11 // pred_check
        %p220 = pneg %p146
      $region30: #{foam_predictor_forward.1} parent=11 // pred_check_branch
        %222 = sbr.rel (%p220) target = $region32
      $region31: #{foam_predictor_forward.1} parent=11 // pred_region
        _
      $region32: #{foam_predictor_forward.1} parent=11 // pred_fallthru
        _
      // Predicated region
      $region33: #{foam_predictor_forward.1} parent=11 // pred_check
        %p223 = pneg %p167
      $region34: #{foam_predictor_forward.1} parent=11 // pred_check_branch
        %225 = sbr.rel (%p223) target = $region36
      $region35: #{foam_predictor_forward.1} parent=11 // pred_region
        _
      $region36: #{foam_predictor_forward.1} parent=11 // pred_fallthru
        _
    $region12: #{foam_predictor_forward.1} parent=5 // pred_fallthru
      _
    %p226 = scmp.lt.s32.totalorder %s15, 2
    // Predicated region
    $region37: #{foam_predictor_forward.1} parent=5 // pred_check
      %p227 = pneg %p226
    $region38: #{foam_predictor_forward.1} parent=5 // pred_check_branch
      %229 = sbr.rel (%p227) target = $region40
    $region39: #{foam_predictor_forward.1} parent=5 // pred_region
      // Predicated region
      $region41: #{foam_predictor_forward.1} parent=39 // pred_check
        %p230 = pneg %p35
      $region42: #{foam_predictor_forward.1} parent=39 // pred_check_branch
        %232 = sbr.rel (%p230) target = $region44
      $region43: #{foam_predictor_forward.1} parent=39 // pred_region
        %s233 = smul.u32 32, %s15
        %p234 = scmp.lt.s32.totalorder %s233, 63
        %s235 = scalar_select %p234, %s233, 63
        %s236 = smul.addr %s235, 8
        %s237 = scalar_lea.vmem %s0, %s236
        %s238 = smul.u32 32, %s15
      $region44: #{foam_predictor_forward.1} parent=39 // pred_fallthru
        _
    $region40: #{foam_predictor_forward.1} parent=5 // pred_fallthru
      _
    %p239 = scmp.le.s32.totalorder 1, %s15
    %p240 = scmp.lt.s32.totalorder %s15, 3
    %p241 = pnand %p239, %p240
    %p242 = pneg %p241
    // Predicated region
    $region45: #{foam_predictor_forward.1} parent=5 // pred_check
      _
    $region46: #{foam_predictor_forward.1} parent=5 // pred_check_branch
      %244 = sbr.rel (%p241) target = $region48
    $region47: #{foam_predictor_forward.1} parent=5 // pred_region
      %s245 = ssub.s32 %s15, 1
      %s246 = smul.u32 32, %s20
      %p247 = scmp.lt.s32.totalorder %s246, 63
      %s248 = scalar_select %p247, %s246, 63
      %s249 = smul.addr %s248, 8
      %s250 = scalar_lea.vmem %s0, %s249
      %p251 = pneg %p41
      %p252 = pneg %p38
      %p253 = pneg %p62
      %p254 = pneg %p59
      %p255 = pneg %p83
      %p256 = pneg %p80
      %p257 = pneg %p104
      %p258 = pneg %p101
      %p259 = pneg %p125
      %p260 = pneg %p122
      %p261 = pneg %p146
      %p262 = pneg %p143
      %p263 = pneg %p167
      %p264 = pneg %p164
      %p265 = pneg %p193
      %p266 = pneg %p190
      %s267 = smul.u32 16, %s20
      %p268 = scmp.lt.s32.totalorder %s267, 31
      %s269 = scalar_select %p268, %s267, 31
      %s270 = scalar_lea.vmem %s7, %s269
      %s271 = smul.u32 32, %s20
      %p272 = scmp.lt.s32.totalorder %s271, 63
      %s273 = scalar_select %p272, %s271, 63
      %s274 = smul.addr %s273, 8
      %s275 = scalar_lea.vmem %s0, %s274
      %s276 = smul.u32 32, %s20
      %s277 = smul.u32 16, %s20
      %p278 = scmp.lt.s32.totalorder %s277, 31
      %s279 = scalar_select %p278, %s277, 31
      %s280 = scalar_lea.vmem %s7, %s279
      %s281 = smul.u32 16, %s20
      %v282 = vlaneseq
      %v283 = vshrl.u32 %v282, 7
      %v284 = vadd.s32 %v283, 8
      %v285 = vadd.s32 %v283, 16
      %v286 = vadd.s32 %v283, 24
      %v287 = vadd.s32 %v283, 32
      %v288 = vadd.s32 %v283, 40
      %v289 = vadd.s32 %v283, 48
      %v290 = vadd.s32 %v283, 56
      %v291 = vadd.s32 %v283, 64
      %v292 = vadd.s32 %v283, 72
      %v293 = vadd.s32 %v283, 80
      %v294 = vadd.s32 %v283, 88
      %v295 = vadd.s32 %v283, 96
      %v296 = vadd.s32 %v283, 104
      %v297 = vadd.s32 %v283, 112
      %v298 = vadd.s32 %v283, 120
      %v299 = vadd.s32 %v283, 128
      %v300 = vadd.s32 %v283, 136
      %v301 = vadd.s32 %v283, 144
      %v302 = vadd.s32 %v283, 152
      %v303 = vadd.s32 %v283, 160
      %v304 = vadd.s32 %v283, 168
      %v305 = vadd.s32 %v283, 176
      %v306 = vadd.s32 %v283, 184
      %v307 = vadd.s32 %v283, 192
      %v308 = vadd.s32 %v283, 200
      %v309 = vadd.s32 %v283, 208
      %v310 = vadd.s32 %v283, 216
      %v311 = vadd.s32 %v283, 224
      %v312 = vadd.s32 %v283, 232
      %v313 = vadd.s32 %v283, 240
      %v314 = vadd.s32 %v283, 248
      %v315 = vand.u32 %v283, 15
      %v316 = vand.u32 %v284, 15
      %v317 = vand.u32 %v285, 15
      %v318 = vand.u32 %v286, 15
      %v319 = vand.u32 %v287, 15
      %v320 = vand.u32 %v288, 15
      %v321 = vand.u32 %v289, 15
      %v322 = vand.u32 %v290, 15
      %v323 = vand.u32 %v291, 15
      %v324 = vand.u32 %v292, 15
      %v325 = vand.u32 %v293, 15
      %v326 = vand.u32 %v294, 15
      %v327 = vand.u32 %v295, 15
      %v328 = vand.u32 %v296, 15
      %v329 = vand.u32 %v297, 15
      %v330 = vand.u32 %v298, 15
      %v331 = vand.u32 %v299, 15
      %v332 = vand.u32 %v300, 15
      %v333 = vand.u32 %v301, 15
      %v334 = vand.u32 %v302, 15
      %v335 = vand.u32 %v303, 15
      %v336 = vand.u32 %v304, 15
      %v337 = vand.u32 %v305, 15
      %v338 = vand.u32 %v306, 15
      %v339 = vand.u32 %v307, 15
      %v340 = vand.u32 %v308, 15
      %v341 = vand.u32 %v309, 15
      %v342 = vand.u32 %v310, 15
      %v343 = vand.u32 %v311, 15
      %v344 = vand.u32 %v312, 15
      %v345 = vand.u32 %v313, 15
      %v346 = vand.u32 %v314, 15
      %v347 = vld [vmem:[%s275] sm:$0xff]
      %v348 = vld [vmem:[%s275 + $0x8] sm:$0xff]
      %v349 = vld [vmem:[%s275 + $0x10] sm:$0xff]
      %v350 = vld [vmem:[%s275 + $0x18] sm:$0xff]
      %v351 = vld [vmem:[%s275 + $0x20] sm:$0xff]
      %v352 = vld [vmem:[%s275 + $0x28] sm:$0xff]
      %v353 = vld [vmem:[%s275 + $0x30] sm:$0xff]
      %v354 = vld [vmem:[%s275 + $0x38] sm:$0xff]
      %v355 = vld [vmem:[%s275 + $0x40] sm:$0xff]
      %v356 = vld [vmem:[%s275 + $0x48] sm:$0xff]
      %v357 = vld [vmem:[%s275 + $0x50] sm:$0xff]
      %v358 = vld [vmem:[%s275 + $0x58] sm:$0xff]
      %v359 = vld [vmem:[%s275 + $0x60] sm:$0xff]
      %v360 = vld [vmem:[%s275 + $0x68] sm:$0xff]
      %v361 = vld [vmem:[%s275 + $0x70] sm:$0xff]
      %v362 = vld [vmem:[%s275 + $0x78] sm:$0xff]
      %v363 = vld [vmem:[%s275 + $0x80] sm:$0xff]
      %v364 = vld [vmem:[%s275 + $0x88] sm:$0xff]
      %v365 = vld [vmem:[%s275 + $0x90] sm:$0xff]
      %v366 = vld [vmem:[%s275 + $0x98] sm:$0xff]
      %v367 = vld [vmem:[%s275 + $0xa0] sm:$0xff]
      %v368 = vld [vmem:[%s275 + $0xa8] sm:$0xff]
      %v369 = vld [vmem:[%s275 + $0xb0] sm:$0xff]
      %v370 = vld [vmem:[%s275 + $0xb8] sm:$0xff]
      %v371 = vld [vmem:[%s275 + $0xc0] sm:$0xff]
      %v372 = vld [vmem:[%s275 + $0xc8] sm:$0xff]
      %v373 = vld [vmem:[%s275 + $0xd0] sm:$0xff]
      %v374 = vld [vmem:[%s275 + $0xd8] sm:$0xff]
      %v375 = vld [vmem:[%s275 + $0xe0] sm:$0xff]
      %v376 = vld [vmem:[%s275 + $0xe8] sm:$0xff]
      %v377 = vld [vmem:[%s275 + $0xf0] sm:$0xff]
      %v378 = vld [vmem:[%s275 + $0xf8] sm:$0xff]
      %vm379 = vcmp.gt.s32.totalorder %v315, 0
      %vm380 = vcmp.gt.s32.totalorder %v316, 0
      %vm381 = vcmp.gt.s32.totalorder %v317, 0
      %vm382 = vcmp.gt.s32.totalorder %v318, 0
      %vm383 = vcmp.gt.s32.totalorder %v319, 0
      %vm384 = vcmp.gt.s32.totalorder %v320, 0
      %vm385 = vcmp.gt.s32.totalorder %v321, 0
      %vm386 = vcmp.gt.s32.totalorder %v322, 0
      %vm387 = vcmp.gt.s32.totalorder %v323, 0
      %vm388 = vcmp.gt.s32.totalorder %v324, 0
      %vm389 = vcmp.gt.s32.totalorder %v325, 0
      %vm390 = vcmp.gt.s32.totalorder %v326, 0
      %vm391 = vcmp.gt.s32.totalorder %v327, 0
      %vm392 = vcmp.gt.s32.totalorder %v328, 0
      %vm393 = vcmp.gt.s32.totalorder %v329, 0
      %vm394 = vcmp.gt.s32.totalorder %v330, 0
      %vm395 = vcmp.gt.s32.totalorder %v331, 0
      %vm396 = vcmp.gt.s32.totalorder %v332, 0
      %vm397 = vcmp.gt.s32.totalorder %v333, 0
      %vm398 = vcmp.gt.s32.totalorder %v334, 0
      %vm399 = vcmp.gt.s32.totalorder %v335, 0
      %vm400 = vcmp.gt.s32.totalorder %v336, 0
      %vm401 = vcmp.gt.s32.totalorder %v337, 0
      %vm402 = vcmp.gt.s32.totalorder %v338, 0
      %vm403 = vcmp.gt.s32.totalorder %v339, 0
      %vm404 = vcmp.gt.s32.totalorder %v340, 0
      %vm405 = vcmp.gt.s32.totalorder %v341, 0
      %vm406 = vcmp.gt.s32.totalorder %v342, 0
      %vm407 = vcmp.gt.s32.totalorder %v343, 0
      %vm408 = vcmp.gt.s32.totalorder %v344, 0
      %vm409 = vcmp.gt.s32.totalorder %v345, 0
      %vm410 = vcmp.gt.s32.totalorder %v346, 0
      %v411 = vrot.slane %v347, 7
      %v412 = vrot.slane %v348, 7
      %v413 = vrot.slane %v349, 7
      %v414 = vrot.slane %v350, 7
      %v415 = vrot.slane %v351, 7
      %v416 = vrot.slane %v352, 7
      %v417 = vrot.slane %v353, 7
      %v418 = vrot.slane %v354, 7
      %v419 = vrot.slane %v355, 7
      %v420 = vrot.slane %v356, 7
      %v421 = vrot.slane %v357, 7
      %v422 = vrot.slane %v358, 7
      %v423 = vrot.slane %v359, 7
      %v424 = vrot.slane %v360, 7
      %v425 = vrot.slane %v361, 7
      %v426 = vrot.slane %v362, 7
      %v427 = vrot.slane %v363, 7
      %v428 = vrot.slane %v364, 7
      %v429 = vrot.slane %v365, 7
      %v430 = vrot.slane %v366, 7
      %v431 = vrot.slane %v367, 7
      %v432 = vrot.slane %v368, 7
      %v433 = vrot.slane %v369, 7
      %v434 = vrot.slane %v370, 7
      %v435 = vrot.slane %v371, 7
      %v436 = vrot.slane %v372, 7
      %v437 = vrot.slane %v373, 7
      %v438 = vrot.slane %v374, 7
      %v439 = vrot.slane %v375, 7
      %v440 = vrot.slane %v376, 7
      %v441 = vrot.slane %v377, 7
      %v442 = vrot.slane %v378, 7
      %vm443 = vcmp.lt.s32.totalorder %v283, 1
      %v444 = vsel %vm443, %v441, %v442
      %v445 = vsel %vm443, %v440, %v441
      %v446 = vsel %vm443, %v439, %v440
      %v447 = vsel %vm443, %v438, %v439
      %v448 = vsel %vm443, %v437, %v438
      %v449 = vsel %vm443, %v436, %v437
      %v450 = vsel %vm443, %v435, %v436
      %v451 = vsel %vm443, %v434, %v435
      %v452 = vsel %vm443, %v433, %v434
      %v453 = vsel %vm443, %v432, %v433
      %v454 = vsel %vm443, %v431, %v432
      %v455 = vsel %vm443, %v430, %v431
      %v456 = vsel %vm443, %v429, %v430
      %v457 = vsel %vm443, %v428, %v429
      %v458 = vsel %vm443, %v427, %v428
      %v459 = vsel %vm443, %v426, %v427
      %v460 = vsel %vm443, %v425, %v426
      %v461 = vsel %vm443, %v424, %v425
      %v462 = vsel %vm443, %v423, %v424
      %v463 = vsel %vm443, %v422, %v423
      %v464 = vsel %vm443, %v421, %v422
      %v465 = vsel %vm443, %v420, %v421
      %v466 = vsel %vm443, %v419, %v420
      %v467 = vsel %vm443, %v418, %v419
      %v468 = vsel %vm443, %v417, %v418
      %v469 = vsel %vm443, %v416, %v417
      %v470 = vsel %vm443, %v415, %v416
      %v471 = vsel %vm443, %v414, %v415
      %v472 = vsel %vm443, %v413, %v414
      %v473 = vsel %vm443, %v412, %v413
      %v474 = vsel %vm443, %v411, %v412
      %v475 = vsel %vm443, %v442, %v411
      %v476 = vsel %vm379, 1, 0
      %v477 = vsel %vm380, 1, 0
      %v478 = vsel %vm381, 1, 0
      %v479 = vsel %vm382, 1, 0
      %v480 = vsel %vm383, 1, 0
      %v481 = vsel %vm384, 1, 0
      %v482 = vsel %vm385, 1, 0
      %v483 = vsel %vm386, 1, 0
      %v484 = vsel %vm387, 1, 0
      %v485 = vsel %vm388, 1, 0
      %v486 = vsel %vm389, 1, 0
      %v487 = vsel %vm390, 1, 0
      %v488 = vsel %vm391, 1, 0
      %v489 = vsel %vm392, 1, 0
      %v490 = vsel %vm393, 1, 0
      %v491 = vsel %vm394, 1, 0
      %v492 = vsel %vm395, 1, 0
      %v493 = vsel %vm396, 1, 0
      %v494 = vsel %vm397, 1, 0
      %v495 = vsel %vm398, 1, 0
      %v496 = vsel %vm399, 1, 0
      %v497 = vsel %vm400, 1, 0
      %v498 = vsel %vm401, 1, 0
      %v499 = vsel %vm402, 1, 0
      %v500 = vsel %vm403, 1, 0
      %v501 = vsel %vm404, 1, 0
      %v502 = vsel %vm405, 1, 0
      %v503 = vsel %vm406, 1, 0
      %v504 = vsel %vm407, 1, 0
      %v505 = vsel %vm408, 1, 0
      %v506 = vsel %vm409, 1, 0
      %v507 = vsel %vm410, 1, 0
      %vm508 = vcmp.eq.s32.totalorder %v476, 1
      %vm509 = vcmp.eq.s32.totalorder %v477, 1
      %vm510 = vcmp.eq.s32.totalorder %v478, 1
      %vm511 = vcmp.eq.s32.totalorder %v479, 1
      %vm512 = vcmp.eq.s32.totalorder %v480, 1
      %vm513 = vcmp.eq.s32.totalorder %v481, 1
      %vm514 = vcmp.eq.s32.totalorder %v482, 1
      %vm515 = vcmp.eq.s32.totalorder %v483, 1
      %vm516 = vcmp.eq.s32.totalorder %v484, 1
      %vm517 = vcmp.eq.s32.totalorder %v485, 1
      %vm518 = vcmp.eq.s32.totalorder %v486, 1
      %vm519 = vcmp.eq.s32.totalorder %v487, 1
      %vm520 = vcmp.eq.s32.totalorder %v488, 1
      %vm521 = vcmp.eq.s32.totalorder %v489, 1
      %vm522 = vcmp.eq.s32.totalorder %v490, 1
      %vm523 = vcmp.eq.s32.totalorder %v491, 1
      %vm524 = vcmp.eq.s32.totalorder %v492, 1
      %vm525 = vcmp.eq.s32.totalorder %v493, 1
      %vm526 = vcmp.eq.s32.totalorder %v494, 1
      %vm527 = vcmp.eq.s32.totalorder %v495, 1
      %vm528 = vcmp.eq.s32.totalorder %v496, 1
      %vm529 = vcmp.eq.s32.totalorder %v497, 1
      %vm530 = vcmp.eq.s32.totalorder %v498, 1
      %vm531 = vcmp.eq.s32.totalorder %v499, 1
      %vm532 = vcmp.eq.s32.totalorder %v500, 1
      %vm533 = vcmp.eq.s32.totalorder %v501, 1
      %vm534 = vcmp.eq.s32.totalorder %v502, 1
      %vm535 = vcmp.eq.s32.totalorder %v503, 1
      %vm536 = vcmp.eq.s32.totalorder %v504, 1
      %vm537 = vcmp.eq.s32.totalorder %v505, 1
      %vm538 = vcmp.eq.s32.totalorder %v506, 1
      %vm539 = vcmp.eq.s32.totalorder %v507, 1
      %v540 = vsel %vm508, %v475, 0.0
      %v541 = vsel %vm509, %v474, 0.0
      %v542 = vsel %vm510, %v473, 0.0
      %v543 = vsel %vm511, %v472, 0.0
      %v544 = vsel %vm512, %v471, 0.0
      %v545 = vsel %vm513, %v470, 0.0
      %v546 = vsel %vm514, %v469, 0.0
      %v547 = vsel %vm515, %v468, 0.0
      %v548 = vsel %vm516, %v467, 0.0
      %v549 = vsel %vm517, %v466, 0.0
      %v550 = vsel %vm518, %v465, 0.0
      %v551 = vsel %vm519, %v464, 0.0
      %v552 = vsel %vm520, %v463, 0.0
      %v553 = vsel %vm521, %v462, 0.0
      %v554 = vsel %vm522, %v461, 0.0
      %v555 = vsel %vm523, %v460, 0.0
      %v556 = vsel %vm524, %v459, 0.0
      %v557 = vsel %vm525, %v458, 0.0
      %v558 = vsel %vm526, %v457, 0.0
      %v559 = vsel %vm527, %v456, 0.0
      %v560 = vsel %vm528, %v455, 0.0
      %v561 = vsel %vm529, %v454, 0.0
      %v562 = vsel %vm530, %v453, 0.0
      %v563 = vsel %vm531, %v452, 0.0
      %v564 = vsel %vm532, %v451, 0.0
      %v565 = vsel %vm533, %v450, 0.0
      %v566 = vsel %vm534, %v449, 0.0
      %v567 = vsel %vm535, %v448, 0.0
      %v568 = vsel %vm536, %v447, 0.0
      %v569 = vsel %vm537, %v446, 0.0
      %v570 = vsel %vm538, %v445, 0.0
      %v571 = vsel %vm539, %v444, 0.0
      %vm572 = vcmp.lt.s32.totalorder %v315, 15
      %vm573 = vcmp.lt.s32.totalorder %v316, 15
      %vm574 = vcmp.lt.s32.totalorder %v317, 15
      %vm575 = vcmp.lt.s32.totalorder %v318, 15
      %vm576 = vcmp.lt.s32.totalorder %v319, 15
      %vm577 = vcmp.lt.s32.totalorder %v320, 15
      %vm578 = vcmp.lt.s32.totalorder %v321, 15
      %vm579 = vcmp.lt.s32.totalorder %v322, 15
      %vm580 = vcmp.lt.s32.totalorder %v323, 15
      %vm581 = vcmp.lt.s32.totalorder %v324, 15
      %vm582 = vcmp.lt.s32.totalorder %v325, 15
      %vm583 = vcmp.lt.s32.totalorder %v326, 15
      %vm584 = vcmp.lt.s32.totalorder %v327, 15
      %vm585 = vcmp.lt.s32.totalorder %v328, 15
      %vm586 = vcmp.lt.s32.totalorder %v329, 15
      %vm587 = vcmp.lt.s32.totalorder %v330, 15
      %vm588 = vcmp.lt.s32.totalorder %v331, 15
      %vm589 = vcmp.lt.s32.totalorder %v332, 15
      %vm590 = vcmp.lt.s32.totalorder %v333, 15
      %vm591 = vcmp.lt.s32.totalorder %v334, 15
      %vm592 = vcmp.lt.s32.totalorder %v335, 15
      %vm593 = vcmp.lt.s32.totalorder %v336, 15
      %vm594 = vcmp.lt.s32.totalorder %v337, 15
      %vm595 = vcmp.lt.s32.totalorder %v338, 15
      %vm596 = vcmp.lt.s32.totalorder %v339, 15
      %vm597 = vcmp.lt.s32.totalorder %v340, 15
      %vm598 = vcmp.lt.s32.totalorder %v341, 15
      %vm599 = vcmp.lt.s32.totalorder %v342, 15
      %vm600 = vcmp.lt.s32.totalorder %v343, 15
      %vm601 = vcmp.lt.s32.totalorder %v344, 15
      %vm602 = vcmp.lt.s32.totalorder %v345, 15
      %vm603 = vcmp.lt.s32.totalorder %v346, 15
      %v604 = vrot.slane %v347, 1
      %v605 = vrot.slane %v348, 1
      %v606 = vrot.slane %v349, 1
      %v607 = vrot.slane %v350, 1
      %v608 = vrot.slane %v351, 1
      %v609 = vrot.slane %v352, 1
      %v610 = vrot.slane %v353, 1
      %v611 = vrot.slane %v354, 1
      %v612 = vrot.slane %v355, 1
      %v613 = vrot.slane %v356, 1
      %v614 = vrot.slane %v357, 1
      %v615 = vrot.slane %v358, 1
      %v616 = vrot.slane %v359, 1
      %v617 = vrot.slane %v360, 1
      %v618 = vrot.slane %v361, 1
      %v619 = vrot.slane %v362, 1
      %v620 = vrot.slane %v363, 1
      %v621 = vrot.slane %v364, 1
      %v622 = vrot.slane %v365, 1
      %v623 = vrot.slane %v366, 1
      %v624 = vrot.slane %v367, 1
      %v625 = vrot.slane %v368, 1
      %v626 = vrot.slane %v369, 1
      %v627 = vrot.slane %v370, 1
      %v628 = vrot.slane %v371, 1
      %v629 = vrot.slane %v372, 1
      %v630 = vrot.slane %v373, 1
      %v631 = vrot.slane %v374, 1
      %v632 = vrot.slane %v375, 1
      %v633 = vrot.slane %v376, 1
      %v634 = vrot.slane %v377, 1
      %v635 = vrot.slane %v378, 1
      %vm636 = vcmp.lt.s32.totalorder %v283, 7
      %v637 = vsel %vm636, %v634, %v635
      %v638 = vsel %vm636, %v633, %v634
      %v639 = vsel %vm636, %v632, %v633
      %v640 = vsel %vm636, %v631, %v632
      %v641 = vsel %vm636, %v630, %v631
      %v642 = vsel %vm636, %v629, %v630
      %v643 = vsel %vm636, %v628, %v629
      %v644 = vsel %vm636, %v627, %v628
      %v645 = vsel %vm636, %v626, %v627
      %v646 = vsel %vm636, %v625, %v626
      %v647 = vsel %vm636, %v624, %v625
      %v648 = vsel %vm636, %v623, %v624
      %v649 = vsel %vm636, %v622, %v623
      %v650 = vsel %vm636, %v621, %v622
      %v651 = vsel %vm636, %v620, %v621
      %v652 = vsel %vm636, %v619, %v620
      %v653 = vsel %vm636, %v618, %v619
      %v654 = vsel %vm636, %v617, %v618
      %v655 = vsel %vm636, %v616, %v617
      %v656 = vsel %vm636, %v615, %v616
      %v657 = vsel %vm636, %v614, %v615
      %v658 = vsel %vm636, %v613, %v614
      %v659 = vsel %vm636, %v612, %v613
      %v660 = vsel %vm636, %v611, %v612
      %v661 = vsel %vm636, %v610, %v611
      %v662 = vsel %vm636, %v609, %v610
      %v663 = vsel %vm636, %v608, %v609
      %v664 = vsel %vm636, %v607, %v608
      %v665 = vsel %vm636, %v606, %v607
      %v666 = vsel %vm636, %v605, %v606
      %v667 = vsel %vm636, %v604, %v605
      %v668 = vsel %vm636, %v635, %v604
      %v669 = vsel %vm572, 1, 0
      %v670 = vsel %vm573, 1, 0
      %v671 = vsel %vm574, 1, 0
      %v672 = vsel %vm575, 1, 0
      %v673 = vsel %vm576, 1, 0
      %v674 = vsel %vm577, 1, 0
      %v675 = vsel %vm578, 1, 0
      %v676 = vsel %vm579, 1, 0
      %v677 = vsel %vm580, 1, 0
      %v678 = vsel %vm581, 1, 0
      %v679 = vsel %vm582, 1, 0
      %v680 = vsel %vm583, 1, 0
      %v681 = vsel %vm584, 1, 0
      %v682 = vsel %vm585, 1, 0
      %v683 = vsel %vm586, 1, 0
      %v684 = vsel %vm587, 1, 0
      %v685 = vsel %vm588, 1, 0
      %v686 = vsel %vm589, 1, 0
      %v687 = vsel %vm590, 1, 0
      %v688 = vsel %vm591, 1, 0
      %v689 = vsel %vm592, 1, 0
      %v690 = vsel %vm593, 1, 0
      %v691 = vsel %vm594, 1, 0
      %v692 = vsel %vm595, 1, 0
      %v693 = vsel %vm596, 1, 0
      %v694 = vsel %vm597, 1, 0
      %v695 = vsel %vm598, 1, 0
      %v696 = vsel %vm599, 1, 0
      %v697 = vsel %vm600, 1, 0
      %v698 = vsel %vm601, 1, 0
      %v699 = vsel %vm602, 1, 0
      %v700 = vsel %vm603, 1, 0
      %vm701 = vcmp.eq.s32.totalorder %v669, 1
      %vm702 = vcmp.eq.s32.totalorder %v670, 1
      %vm703 = vcmp.eq.s32.totalorder %v671, 1
      %vm704 = vcmp.eq.s32.totalorder %v672, 1
      %vm705 = vcmp.eq.s32.totalorder %v673, 1
      %vm706 = vcmp.eq.s32.totalorder %v674, 1
      %vm707 = vcmp.eq.s32.totalorder %v675, 1
      %vm708 = vcmp.eq.s32.totalorder %v676, 1
      %vm709 = vcmp.eq.s32.totalorder %v677, 1
      %vm710 = vcmp.eq.s32.totalorder %v678, 1
      %vm711 = vcmp.eq.s32.totalorder %v679, 1
      %vm712 = vcmp.eq.s32.totalorder %v680, 1
      %vm713 = vcmp.eq.s32.totalorder %v681, 1
      %vm714 = vcmp.eq.s32.totalorder %v682, 1
      %vm715 = vcmp.eq.s32.totalorder %v683, 1
      %vm716 = vcmp.eq.s32.totalorder %v684, 1
      %vm717 = vcmp.eq.s32.totalorder %v685, 1
      %vm718 = vcmp.eq.s32.totalorder %v686, 1
      %vm719 = vcmp.eq.s32.totalorder %v687, 1
      %vm720 = vcmp.eq.s32.totalorder %v688, 1
      %vm721 = vcmp.eq.s32.totalorder %v689, 1
      %vm722 = vcmp.eq.s32.totalorder %v690, 1
      %vm723 = vcmp.eq.s32.totalorder %v691, 1
      %vm724 = vcmp.eq.s32.totalorder %v692, 1
      %vm725 = vcmp.eq.s32.totalorder %v693, 1
      %vm726 = vcmp.eq.s32.totalorder %v694, 1
      %vm727 = vcmp.eq.s32.totalorder %v695, 1
      %vm728 = vcmp.eq.s32.totalorder %v696, 1
      %vm729 = vcmp.eq.s32.totalorder %v697, 1
      %vm730 = vcmp.eq.s32.totalorder %v698, 1
      %vm731 = vcmp.eq.s32.totalorder %v699, 1
      %vm732 = vcmp.eq.s32.totalorder %v700, 1
      %v733 = vsel %vm701, %v667, 0.0
      %v734 = vsel %vm702, %v666, 0.0
      %v735 = vsel %vm703, %v665, 0.0
      %v736 = vsel %vm704, %v664, 0.0
      %v737 = vsel %vm705, %v663, 0.0
      %v738 = vsel %vm706, %v662, 0.0
      %v739 = vsel %vm707, %v661, 0.0
      %v740 = vsel %vm708, %v660, 0.0
      %v741 = vsel %vm709, %v659, 0.0
      %v742 = vsel %vm710, %v658, 0.0
      %v743 = vsel %vm711, %v657, 0.0
      %v744 = vsel %vm712, %v656, 0.0
      %v745 = vsel %vm713, %v655, 0.0
      %v746 = vsel %vm714, %v654, 0.0
      %v747 = vsel %vm715, %v653, 0.0
      %v748 = vsel %vm716, %v652, 0.0
      %v749 = vsel %vm717, %v651, 0.0
      %v750 = vsel %vm718, %v650, 0.0
      %v751 = vsel %vm719, %v649, 0.0
      %v752 = vsel %vm720, %v648, 0.0
      %v753 = vsel %vm721, %v647, 0.0
      %v754 = vsel %vm722, %v646, 0.0
      %v755 = vsel %vm723, %v645, 0.0
      %v756 = vsel %vm724, %v644, 0.0
      %v757 = vsel %vm725, %v643, 0.0
      %v758 = vsel %vm726, %v642, 0.0
      %v759 = vsel %vm727, %v641, 0.0
      %v760 = vsel %vm728, %v640, 0.0
      %v761 = vsel %vm729, %v639, 0.0
      %v762 = vsel %vm730, %v638, 0.0
      %v763 = vsel %vm731, %v637, 0.0
      %v764 = vsel %vm732, %v668, 0.0
      %797 = vrot.lane.b32.xlu0 %v347, 16
      %v798 = vpop.permute.xlu0 %797
      %799 = vrot.lane.b32.xlu0 %v348, 16
      %v800 = vpop.permute.xlu0 %799
      %801 = vrot.lane.b32.xlu0 %v349, 16
      %v802 = vpop.permute.xlu0 %801
      %803 = vrot.lane.b32.xlu0 %v350, 16
      %v804 = vpop.permute.xlu0 %803
      %805 = vrot.lane.b32.xlu0 %v351, 16
      %v806 = vpop.permute.xlu0 %805
      %807 = vrot.lane.b32.xlu0 %v352, 16
      %v808 = vpop.permute.xlu0 %807
      %809 = vrot.lane.b32.xlu0 %v353, 16
      %v810 = vpop.permute.xlu0 %809
      %811 = vrot.lane.b32.xlu0 %v354, 16
      %v812 = vpop.permute.xlu0 %811
      %813 = vrot.lane.b32.xlu0 %v355, 16
      %v814 = vpop.permute.xlu0 %813
      %815 = vrot.lane.b32.xlu0 %v356, 16
      %v816 = vpop.permute.xlu0 %815
      %817 = vrot.lane.b32.xlu0 %v357, 16
      %v818 = vpop.permute.xlu0 %817
      %819 = vrot.lane.b32.xlu0 %v358, 16
      %v820 = vpop.permute.xlu0 %819
      %821 = vrot.lane.b32.xlu0 %v359, 16
      %v822 = vpop.permute.xlu0 %821
      %823 = vrot.lane.b32.xlu0 %v360, 16
      %v824 = vpop.permute.xlu0 %823
      %825 = vrot.lane.b32.xlu0 %v361, 16
      %v826 = vpop.permute.xlu0 %825
      %827 = vrot.lane.b32.xlu0 %v362, 16
      %v828 = vpop.permute.xlu0 %827
      %829 = vrot.lane.b32.xlu0 %v363, 16
      %v830 = vpop.permute.xlu0 %829
      %831 = vrot.lane.b32.xlu0 %v364, 16
      %v832 = vpop.permute.xlu0 %831
      %833 = vrot.lane.b32.xlu0 %v365, 16
      %v834 = vpop.permute.xlu0 %833
      %835 = vrot.lane.b32.xlu0 %v366, 16
      %v836 = vpop.permute.xlu0 %835
      %837 = vrot.lane.b32.xlu0 %v367, 16
      %v838 = vpop.permute.xlu0 %837
      %839 = vrot.lane.b32.xlu0 %v368, 16
      %v840 = vpop.permute.xlu0 %839
      %841 = vrot.lane.b32.xlu0 %v369, 16
      %v842 = vpop.permute.xlu0 %841
      %843 = vrot.lane.b32.xlu0 %v370, 16
      %v844 = vpop.permute.xlu0 %843
      %845 = vrot.lane.b32.xlu0 %v371, 16
      %v846 = vpop.permute.xlu0 %845
      %847 = vrot.lane.b32.xlu0 %v372, 16
      %v848 = vpop.permute.xlu0 %847
      %849 = vrot.lane.b32.xlu0 %v373, 16
      %v850 = vpop.permute.xlu0 %849
      %851 = vrot.lane.b32.xlu0 %v374, 16
      %v852 = vpop.permute.xlu0 %851
      %853 = vrot.lane.b32.xlu0 %v375, 16
      %v854 = vpop.permute.xlu0 %853
      %855 = vrot.lane.b32.xlu0 %v376, 16
      %v856 = vpop.permute.xlu0 %855
      %857 = vrot.lane.b32.xlu0 %v377, 16
      %v858 = vpop.permute.xlu0 %857
      %859 = vrot.lane.b32.xlu0 %v378, 16
      %v860 = vpop.permute.xlu0 %859
      %925 = vrot.lane.b32.xlu0 %v733, 32
      %v926 = vpop.permute.xlu0 %925
      %927 = vrot.lane.b32.xlu0 %v734, 32
      %v928 = vpop.permute.xlu0 %927
      %929 = vrot.lane.b32.xlu0 %v735, 32
      %v930 = vpop.permute.xlu0 %929
      %931 = vrot.lane.b32.xlu0 %v736, 32
      %v932 = vpop.permute.xlu0 %931
      %933 = vrot.lane.b32.xlu0 %v737, 32
      %v934 = vpop.permute.xlu0 %933
      %935 = vrot.lane.b32.xlu0 %v738, 32
      %v936 = vpop.permute.xlu0 %935
      %937 = vrot.lane.b32.xlu0 %v739, 32
      %v938 = vpop.permute.xlu0 %937
      %939 = vrot.lane.b32.xlu0 %v740, 32
      %v940 = vpop.permute.xlu0 %939
      %941 = vrot.lane.b32.xlu0 %v741, 32
      %v942 = vpop.permute.xlu0 %941
      %943 = vrot.lane.b32.xlu0 %v742, 32
      %v944 = vpop.permute.xlu0 %943
      %945 = vrot.lane.b32.xlu0 %v743, 32
      %v946 = vpop.permute.xlu0 %945
      %947 = vrot.lane.b32.xlu0 %v744, 32
      %v948 = vpop.permute.xlu0 %947
      %949 = vrot.lane.b32.xlu0 %v745, 32
      %v950 = vpop.permute.xlu0 %949
      %951 = vrot.lane.b32.xlu0 %v746, 32
      %v952 = vpop.permute.xlu0 %951
      %953 = vrot.lane.b32.xlu0 %v747, 32
      %v954 = vpop.permute.xlu0 %953
      %955 = vrot.lane.b32.xlu0 %v748, 32
      %v956 = vpop.permute.xlu0 %955
      %957 = vrot.lane.b32.xlu0 %v749, 32
      %v958 = vpop.permute.xlu0 %957
      %959 = vrot.lane.b32.xlu0 %v750, 32
      %v960 = vpop.permute.xlu0 %959
      %961 = vrot.lane.b32.xlu0 %v751, 32
      %v962 = vpop.permute.xlu0 %961
      %963 = vrot.lane.b32.xlu0 %v752, 32
      %v964 = vpop.permute.xlu0 %963
      %965 = vrot.lane.b32.xlu0 %v753, 32
      %v966 = vpop.permute.xlu0 %965
      %967 = vrot.lane.b32.xlu0 %v754, 32
      %v968 = vpop.permute.xlu0 %967
      %969 = vrot.lane.b32.xlu0 %v755, 32
      %v970 = vpop.permute.xlu0 %969
      %971 = vrot.lane.b32.xlu0 %v756, 32
      %v972 = vpop.permute.xlu0 %971
      %973 = vrot.lane.b32.xlu0 %v757, 32
      %v974 = vpop.permute.xlu0 %973
      %975 = vrot.lane.b32.xlu0 %v758, 32
      %v976 = vpop.permute.xlu0 %975
      %977 = vrot.lane.b32.xlu0 %v759, 32
      %v978 = vpop.permute.xlu0 %977
      %979 = vrot.lane.b32.xlu0 %v760, 32
      %v980 = vpop.permute.xlu0 %979
      %981 = vrot.lane.b32.xlu0 %v761, 32
      %v982 = vpop.permute.xlu0 %981
      %983 = vrot.lane.b32.xlu0 %v762, 32
      %v984 = vpop.permute.xlu0 %983
      %985 = vrot.lane.b32.xlu0 %v763, 32
      %v986 = vpop.permute.xlu0 %985
      %987 = vrot.lane.b32.xlu0 %v764, 32
      %v988 = vpop.permute.xlu0 %987
      %vm1021 = vcmask 130048
      %v1022 = vsel %vm1021, %v540, %v798
      %v1023 = vsel %vm1021, %v541, %v800
      %v1024 = vsel %vm1021, %v542, %v802
      %v1025 = vsel %vm1021, %v543, %v804
      %v1026 = vsel %vm1021, %v544, %v806
      %v1027 = vsel %vm1021, %v545, %v808
      %v1028 = vsel %vm1021, %v546, %v810
      %v1029 = vsel %vm1021, %v547, %v812
      %v1030 = vsel %vm1021, %v548, %v814
      %v1031 = vsel %vm1021, %v549, %v816
      %v1032 = vsel %vm1021, %v550, %v818
      %v1033 = vsel %vm1021, %v551, %v820
      %v1034 = vsel %vm1021, %v552, %v822
      %v1035 = vsel %vm1021, %v553, %v824
      %v1036 = vsel %vm1021, %v554, %v826
      %v1037 = vsel %vm1021, %v555, %v828
      %v1038 = vsel %vm1021, %v556, %v830
      %v1039 = vsel %vm1021, %v557, %v832
      %v1040 = vsel %vm1021, %v558, %v834
      %v1041 = vsel %vm1021, %v559, %v836
      %v1042 = vsel %vm1021, %v560, %v838
      %v1043 = vsel %vm1021, %v561, %v840
      %v1044 = vsel %vm1021, %v562, %v842
      %v1045 = vsel %vm1021, %v563, %v844
      %v1046 = vsel %vm1021, %v564, %v846
      %v1047 = vsel %vm1021, %v565, %v848
      %v1048 = vsel %vm1021, %v566, %v850
      %v1049 = vsel %vm1021, %v567, %v852
      %v1050 = vsel %vm1021, %v568, %v854
      %v1051 = vsel %vm1021, %v569, %v856
      %v1052 = vsel %vm1021, %v570, %v858
      %v1053 = vsel %vm1021, %v571, %v860
      %vm1054 = vcmask 261120
      %v1055 = vsel %vm1054, %v1022, %v926
      %v1056 = vsel %vm1054, %v1023, %v928
      %v1057 = vsel %vm1054, %v1024, %v930
      %v1058 = vsel %vm1054, %v1025, %v932
      %v1059 = vsel %vm1054, %v1026, %v934
      %v1060 = vsel %vm1054, %v1027, %v936
      %v1061 = vsel %vm1054, %v1028, %v938
      %v1062 = vsel %vm1054, %v1029, %v940
      %v1063 = vsel %vm1054, %v1030, %v942
      %v1064 = vsel %vm1054, %v1031, %v944
      %v1065 = vsel %vm1054, %v1032, %v946
      %v1066 = vsel %vm1054, %v1033, %v948
      %v1067 = vsel %vm1054, %v1034, %v950
      %v1068 = vsel %vm1054, %v1035, %v952
      %v1069 = vsel %vm1054, %v1036, %v954
      %v1070 = vsel %vm1054, %v1037, %v956
      %v1071 = vsel %vm1054, %v1038, %v958
      %v1072 = vsel %vm1054, %v1039, %v960
      %v1073 = vsel %vm1054, %v1040, %v962
      %v1074 = vsel %vm1054, %v1041, %v964
      %v1075 = vsel %vm1054, %v1042, %v966
      %v1076 = vsel %vm1054, %v1043, %v968
      %v1077 = vsel %vm1054, %v1044, %v970
      %v1078 = vsel %vm1054, %v1045, %v972
      %v1079 = vsel %vm1054, %v1046, %v974
      %v1080 = vsel %vm1054, %v1047, %v976
      %v1081 = vsel %vm1054, %v1048, %v978
      %v1082 = vsel %vm1054, %v1049, %v980
      %v1083 = vsel %vm1054, %v1050, %v982
      %v1084 = vsel %vm1054, %v1051, %v984
      %v1085 = vsel %vm1054, %v1052, %v986
      %v1086 = vsel %vm1054, %v1053, %v988
      %v1087 = vld [vmem:[%s1] sm:$0xff]
      %v1088 = vld [vmem:[%s1 + $0x8] sm:$0xff]
      %v1089 = vld [vmem:[%s1 + $0x10] sm:$0xff]
      %v1090 = vld [vmem:[%s1 + $0x18] sm:$0xff]
      %v1091 = vld [vmem:[%s1 + $0x20] sm:$0xff]
      %v1092 = vld [vmem:[%s1 + $0x28] sm:$0xff]
      %v1093 = vld [vmem:[%s2] sm:$0x1]
      %v1095 = vlaneseq
      %v1096 = vshrl.u32 %v1095, 7
      %v1097 = vsub.s32 0, %v1096
      %v1098 = vrot.slane %v1093, %v1097
      %vm1100 = vcmask 392192
      %v1102 = vsel %vm1100, %v1055, 0
      %v1105 = vsel %vm1100, %v1056, 0
      %v1108 = vsel %vm1100, %v1057, 0
      %v1111 = vsel %vm1100, %v1058, 0
      %v1114 = vsel %vm1100, %v1059, 0
      %v1117 = vsel %vm1100, %v1060, 0
      %v1120 = vsel %vm1100, %v1061, 0
      %v1123 = vsel %vm1100, %v1062, 0
      %v1126 = vsel %vm1100, %v1063, 0
      %v1129 = vsel %vm1100, %v1064, 0
      %v1132 = vsel %vm1100, %v1065, 0
      %v1135 = vsel %vm1100, %v1066, 0
      %v1138 = vsel %vm1100, %v1067, 0
      %v1141 = vsel %vm1100, %v1068, 0
      %v1144 = vsel %vm1100, %v1069, 0
      %v1147 = vsel %vm1100, %v1070, 0
      %v1150 = vsel %vm1100, %v1071, 0
      %v1153 = vsel %vm1100, %v1072, 0
      %v1156 = vsel %vm1100, %v1073, 0
      %v1159 = vsel %vm1100, %v1074, 0
      %v1162 = vsel %vm1100, %v1075, 0
      %v1165 = vsel %vm1100, %v1076, 0
      %v1168 = vsel %vm1100, %v1077, 0
      %v1171 = vsel %vm1100, %v1078, 0
      %v1174 = vsel %vm1100, %v1079, 0
      %v1177 = vsel %vm1100, %v1080, 0
      %v1180 = vsel %vm1100, %v1081, 0
      %v1183 = vsel %vm1100, %v1082, 0
      %v1186 = vsel %vm1100, %v1083, 0
      %v1189 = vsel %vm1100, %v1084, 0
      %v1192 = vsel %vm1100, %v1085, 0
      %v1195 = vsel %vm1100, %v1086, 0
      %1197 = vmatprep.subr.mxu0 0.0
      %1198 = vmatpush1.msra.mxu0 0.0
      %1199 = vmatprep.subr.mxu0 0.0
      %1200 = vmatpush1.msra.mxu0 0.0
      %1201 = vmatprep.subr.mxu0 0.0
      %1202 = vmatpush1.msra.mxu0 0.0
      %1203 = vmatprep.subr.mxu0 0.0
      %1204 = vmatpush1.msra.mxu0 0.0
      %1205 = vmatprep.subr.mxu0 0.0
      %1206 = vmatpush1.msra.mxu0 0.0
      %1207 = vmatprep.subr.mxu0 0.0
      %1208 = vmatpush1.msra.mxu0 0.0
      %1209 = vmatprep.subr.mxu0 0.0
      %1210 = vmatpush1.msra.mxu0 0.0
      %1211 = vmatprep.subr.mxu0 0.0
      %1212 = vmatpush1.msra.mxu0 0.0
      %1213 = vmatprep.subr.mxu0 0.0
      %1214 = vmatpush1.msra.mxu0 0.0
      %1215 = vmatprep.subr.mxu0 0.0
      %1216 = vmatpush1.msra.mxu0 0.0
      %1217 = vmatprep.subr.mxu0 0.0
      %1218 = vmatpush1.msra.mxu0 %v1092
      %1219 = vmatprep.subr.mxu0 0.0
      %1220 = vmatpush1.msra.mxu0 %v1091
      %1221 = vmatprep.subr.mxu0 0.0
      %1222 = vmatpush1.msra.mxu0 %v1090
      %1223 = vmatprep.subr.mxu0 0.0
      %1224 = vmatpush1.msra.mxu0 %v1089
      %1225 = vmatprep.subr.mxu0 0.0
      %1226 = vmatpush1.msra.mxu0 %v1088
      %1227 = vmatprep.subr.mxu0 0.0
      %1228 = vmatpush1.msra.mxu0 %v1087
      %1229 = vmatprep.subr.mxu0 0.0
      %1230 = vmatpush2.msra.mxu0 0.0
      %1231 = vmatprep.subr.mxu0 0.0
      %1232 = vmatpush2.msra.mxu0 0.0
      %1233 = vmatprep.subr.mxu0 0.0
      %1234 = vmatpush2.msra.mxu0 0.0
      %1235 = vmatprep.subr.mxu0 0.0
      %1236 = vmatpush2.msra.mxu0 0.0
      %1237 = vmatprep.subr.mxu0 0.0
      %1238 = vmatpush2.msra.mxu0 0.0
      %1239 = vmatprep.subr.mxu0 0.0
      %1240 = vmatpush2.msra.mxu0 0.0
      %1241 = vmatprep.subr.mxu0 0.0
      %1242 = vmatpush2.msra.mxu0 0.0
      %1243 = vmatprep.subr.mxu0 0.0
      %1244 = vmatpush2.msra.mxu0 0.0
      %1245 = vmatprep.subr.mxu0 0.0
      %1246 = vmatpush2.msra.mxu0 0.0
      %1247 = vmatprep.subr.mxu0 0.0
      %1248 = vmatpush2.msra.mxu0 0.0
      %1249 = vmatprep.subr.mxu0 0.0
      %1250 = vmatpush2.msra.mxu0 0.0
      %1251 = vmatprep.subr.mxu0 0.0
      %1252 = vmatpush2.msra.mxu0 0.0
      %1253 = vmatprep.subr.mxu0 0.0
      %1254 = vmatpush2.msra.mxu0 0.0
      %1255 = vmatprep.subr.mxu0 0.0
      %1256 = vmatpush2.msra.mxu0 0.0
      %1257 = vmatprep.subr.mxu0 0.0
      %1258 = vmatpush2.msra.mxu0 0.0
      %1259 = vmatprep.subr.mxu0 0.0
      %1260 = vmatpush2.msra.mxu0 0.0
      %1261 = vmatprep.mubr.f32.mxu0 0.0
      %1262 = vmatmul.mubr.f32.gmra.mxu0 %v1102
      %v1263 = vpop.f32.mrf.mxu0
      %v1264 = vadd.f32 %v1098, %v1263
      %v1265 = vpop.f32.mrf.mxu0
      %1266 = vmatprep.mubr.f32.mxu0 0.0
      %1267 = vmatmul.mubr.f32.gmra.mxu0 %v1105
      %v1268 = vpop.f32.mrf.mxu0
      %v1269 = vadd.f32 %v1098, %v1268
      %v1270 = vpop.f32.mrf.mxu0
      %1271 = vmatprep.mubr.f32.mxu0 0.0
      %1272 = vmatmul.mubr.f32.gmra.mxu0 %v1108
      %v1273 = vpop.f32.mrf.mxu0
      %v1274 = vadd.f32 %v1098, %v1273
      %v1275 = vpop.f32.mrf.mxu0
      %1276 = vmatprep.mubr.f32.mxu0 0.0
      %1277 = vmatmul.mubr.f32.gmra.mxu0 %v1111
      %v1278 = vpop.f32.mrf.mxu0
      %v1279 = vadd.f32 %v1098, %v1278
      %v1280 = vpop.f32.mrf.mxu0
      %1281 = vmatprep.mubr.f32.mxu0 0.0
      %1282 = vmatmul.mubr.f32.gmra.mxu0 %v1114
      %v1283 = vpop.f32.mrf.mxu0
      %v1284 = vadd.f32 %v1098, %v1283
      %v1285 = vpop.f32.mrf.mxu0
      %1286 = vmatprep.mubr.f32.mxu0 0.0
      %1287 = vmatmul.mubr.f32.gmra.mxu0 %v1117
      %v1288 = vpop.f32.mrf.mxu0
      %v1289 = vadd.f32 %v1098, %v1288
      %v1290 = vpop.f32.mrf.mxu0
      %1291 = vmatprep.mubr.f32.mxu0 0.0
      %1292 = vmatmul.mubr.f32.gmra.mxu0 %v1120
      %v1293 = vpop.f32.mrf.mxu0
      %v1294 = vadd.f32 %v1098, %v1293
      %v1295 = vpop.f32.mrf.mxu0
      %1296 = vmatprep.mubr.f32.mxu0 0.0
      %1297 = vmatmul.mubr.f32.gmra.mxu0 %v1123
      %v1298 = vpop.f32.mrf.mxu0
      %v1299 = vadd.f32 %v1098, %v1298
      %v1300 = vpop.f32.mrf.mxu0
      %1301 = vmatprep.mubr.f32.mxu0 0.0
      %1302 = vmatmul.mubr.f32.gmra.mxu0 %v1126
      %v1303 = vpop.f32.mrf.mxu0
      %v1304 = vadd.f32 %v1098, %v1303
      %v1305 = vpop.f32.mrf.mxu0
      %1306 = vmatprep.mubr.f32.mxu0 0.0
      %1307 = vmatmul.mubr.f32.gmra.mxu0 %v1129
      %v1308 = vpop.f32.mrf.mxu0
      %v1309 = vadd.f32 %v1098, %v1308
      %v1310 = vpop.f32.mrf.mxu0
      %1311 = vmatprep.mubr.f32.mxu0 0.0
      %1312 = vmatmul.mubr.f32.gmra.mxu0 %v1132
      %v1313 = vpop.f32.mrf.mxu0
      %v1314 = vadd.f32 %v1098, %v1313
      %v1315 = vpop.f32.mrf.mxu0
      %1316 = vmatprep.mubr.f32.mxu0 0.0
      %1317 = vmatmul.mubr.f32.gmra.mxu0 %v1135
      %v1318 = vpop.f32.mrf.mxu0
      %v1319 = vadd.f32 %v1098, %v1318
      %v1320 = vpop.f32.mrf.mxu0
      %1321 = vmatprep.mubr.f32.mxu0 0.0
      %1322 = vmatmul.mubr.f32.gmra.mxu0 %v1138
      %v1323 = vpop.f32.mrf.mxu0
      %v1324 = vadd.f32 %v1098, %v1323
      %v1325 = vpop.f32.mrf.mxu0
      %1326 = vmatprep.mubr.f32.mxu0 0.0
      %1327 = vmatmul.mubr.f32.gmra.mxu0 %v1141
      %v1328 = vpop.f32.mrf.mxu0
      %v1329 = vadd.f32 %v1098, %v1328
      %v1330 = vpop.f32.mrf.mxu0
      %1331 = vmatprep.mubr.f32.mxu0 0.0
      %1332 = vmatmul.mubr.f32.gmra.mxu0 %v1144
      %v1333 = vpop.f32.mrf.mxu0
      %v1334 = vadd.f32 %v1098, %v1333
      %v1335 = vpop.f32.mrf.mxu0
      %1336 = vmatprep.mubr.f32.mxu0 0.0
      %1337 = vmatmul.mubr.f32.gmra.mxu0 %v1147
      %v1338 = vpop.f32.mrf.mxu0
      %v1339 = vadd.f32 %v1098, %v1338
      %v1340 = vpop.f32.mrf.mxu0
      %1341 = vmatprep.mubr.f32.mxu0 0.0
      %1342 = vmatmul.mubr.f32.gmra.mxu0 %v1150
      %v1343 = vpop.f32.mrf.mxu0
      %v1344 = vadd.f32 %v1098, %v1343
      %v1345 = vpop.f32.mrf.mxu0
      %1346 = vmatprep.mubr.f32.mxu0 0.0
      %1347 = vmatmul.mubr.f32.gmra.mxu0 %v1153
      %v1348 = vpop.f32.mrf.mxu0
      %v1349 = vadd.f32 %v1098, %v1348
      %v1350 = vpop.f32.mrf.mxu0
      %1351 = vmatprep.mubr.f32.mxu0 0.0
      %1352 = vmatmul.mubr.f32.gmra.mxu0 %v1156
      %v1353 = vpop.f32.mrf.mxu0
      %v1354 = vadd.f32 %v1098, %v1353
      %v1355 = vpop.f32.mrf.mxu0
      %1356 = vmatprep.mubr.f32.mxu0 0.0
      %1357 = vmatmul.mubr.f32.gmra.mxu0 %v1159
      %v1358 = vpop.f32.mrf.mxu0
      %v1359 = vadd.f32 %v1098, %v1358
      %v1360 = vpop.f32.mrf.mxu0
      %1361 = vmatprep.mubr.f32.mxu0 0.0
      %1362 = vmatmul.mubr.f32.gmra.mxu0 %v1162
      %v1363 = vpop.f32.mrf.mxu0
      %v1364 = vadd.f32 %v1098, %v1363
      %v1365 = vpop.f32.mrf.mxu0
      %1366 = vmatprep.mubr.f32.mxu0 0.0
      %1367 = vmatmul.mubr.f32.gmra.mxu0 %v1165
      %v1368 = vpop.f32.mrf.mxu0
      %v1369 = vadd.f32 %v1098, %v1368
      %v1370 = vpop.f32.mrf.mxu0
      %1371 = vmatprep.mubr.f32.mxu0 0.0
      %1372 = vmatmul.mubr.f32.gmra.mxu0 %v1168
      %v1373 = vpop.f32.mrf.mxu0
      %v1374 = vadd.f32 %v1098, %v1373
      %v1375 = vpop.f32.mrf.mxu0
      %1376 = vmatprep.mubr.f32.mxu0 0.0
      %1377 = vmatmul.mubr.f32.gmra.mxu0 %v1171
      %v1378 = vpop.f32.mrf.mxu0
      %v1379 = vadd.f32 %v1098, %v1378
      %v1380 = vpop.f32.mrf.mxu0
      %1381 = vmatprep.mubr.f32.mxu0 0.0
      %1382 = vmatmul.mubr.f32.gmra.mxu0 %v1174
      %v1383 = vpop.f32.mrf.mxu0
      %v1384 = vadd.f32 %v1098, %v1383
      %v1385 = vpop.f32.mrf.mxu0
      %1386 = vmatprep.mubr.f32.mxu0 0.0
      %1387 = vmatmul.mubr.f32.gmra.mxu0 %v1177
      %v1388 = vpop.f32.mrf.mxu0
      %v1389 = vadd.f32 %v1098, %v1388
      %v1390 = vpop.f32.mrf.mxu0
      %1391 = vmatprep.mubr.f32.mxu0 0.0
      %1392 = vmatmul.mubr.f32.gmra.mxu0 %v1180
      %v1393 = vpop.f32.mrf.mxu0
      %v1394 = vadd.f32 %v1098, %v1393
      %v1395 = vpop.f32.mrf.mxu0
      %1396 = vmatprep.mubr.f32.mxu0 0.0
      %1397 = vmatmul.mubr.f32.gmra.mxu0 %v1183
      %v1398 = vpop.f32.mrf.mxu0
      %v1399 = vadd.f32 %v1098, %v1398
      %v1400 = vpop.f32.mrf.mxu0
      %1401 = vmatprep.mubr.f32.mxu0 0.0
      %1402 = vmatmul.mubr.f32.gmra.mxu0 %v1186
      %v1403 = vpop.f32.mrf.mxu0
      %v1404 = vadd.f32 %v1098, %v1403
      %v1405 = vpop.f32.mrf.mxu0
      %1406 = vmatprep.mubr.f32.mxu0 0.0
      %1407 = vmatmul.mubr.f32.gmra.mxu0 %v1189
      %v1408 = vpop.f32.mrf.mxu0
      %v1409 = vadd.f32 %v1098, %v1408
      %v1410 = vpop.f32.mrf.mxu0
      %1411 = vmatprep.mubr.f32.mxu0 0.0
      %1412 = vmatmul.mubr.f32.gmra.mxu0 %v1192
      %v1413 = vpop.f32.mrf.mxu0
      %v1414 = vadd.f32 %v1098, %v1413
      %v1415 = vpop.f32.mrf.mxu0
      %1416 = vmatprep.mubr.f32.mxu0 0.0
      %1417 = vmatmul.mubr.f32.gmra.mxu0 %v1195
      %v1418 = vpop.f32.mrf.mxu0
      %v1419 = vadd.f32 %v1098, %v1418
      %v1420 = vpop.f32.mrf.mxu0
      %1421 = vdwg.mxu0
      %v1422 = vmax.f32 %v1264, 0.0
      %v1423 = vmax.f32 %v1269, 0.0
      %v1424 = vmax.f32 %v1274, 0.0
      %v1425 = vmax.f32 %v1279, 0.0
      %v1426 = vmax.f32 %v1284, 0.0
      %v1427 = vmax.f32 %v1289, 0.0
      %v1428 = vmax.f32 %v1294, 0.0
      %v1429 = vmax.f32 %v1299, 0.0
      %v1430 = vmax.f32 %v1304, 0.0
      %v1431 = vmax.f32 %v1309, 0.0
      %v1432 = vmax.f32 %v1314, 0.0
      %v1433 = vmax.f32 %v1319, 0.0
      %v1434 = vmax.f32 %v1324, 0.0
      %v1435 = vmax.f32 %v1329, 0.0
      %v1436 = vmax.f32 %v1334, 0.0
      %v1437 = vmax.f32 %v1339, 0.0
      %v1438 = vmax.f32 %v1344, 0.0
      %v1439 = vmax.f32 %v1349, 0.0
      %v1440 = vmax.f32 %v1354, 0.0
      %v1441 = vmax.f32 %v1359, 0.0
      %v1442 = vmax.f32 %v1364, 0.0
      %v1443 = vmax.f32 %v1369, 0.0
      %v1444 = vmax.f32 %v1374, 0.0
      %v1445 = vmax.f32 %v1379, 0.0
      %v1446 = vmax.f32 %v1384, 0.0
      %v1447 = vmax.f32 %v1389, 0.0
      %v1448 = vmax.f32 %v1394, 0.0
      %v1449 = vmax.f32 %v1399, 0.0
      %v1450 = vmax.f32 %v1404, 0.0
      %v1451 = vmax.f32 %v1409, 0.0
      %v1452 = vmax.f32 %v1414, 0.0
      %v1453 = vmax.f32 %v1419, 0.0
      %v1454 = vrot.slane %v1422, 1
      %v1455 = vrot.slane %v1423, 1
      %v1456 = vrot.slane %v1424, 1
      %v1457 = vrot.slane %v1425, 1
      %v1458 = vrot.slane %v1426, 1
      %v1459 = vrot.slane %v1427, 1
      %v1460 = vrot.slane %v1428, 1
      %v1461 = vrot.slane %v1429, 1
      %v1462 = vrot.slane %v1430, 1
      %v1463 = vrot.slane %v1431, 1
      %v1464 = vrot.slane %v1432, 1
      %v1465 = vrot.slane %v1433, 1
      %v1466 = vrot.slane %v1434, 1
      %v1467 = vrot.slane %v1435, 1
      %v1468 = vrot.slane %v1436, 1
      %v1469 = vrot.slane %v1437, 1
      %v1470 = vrot.slane %v1438, 1
      %v1471 = vrot.slane %v1439, 1
      %v1472 = vrot.slane %v1440, 1
      %v1473 = vrot.slane %v1441, 1
      %v1474 = vrot.slane %v1442, 1
      %v1475 = vrot.slane %v1443, 1
      %v1476 = vrot.slane %v1444, 1
      %v1477 = vrot.slane %v1445, 1
      %v1478 = vrot.slane %v1446, 1
      %v1479 = vrot.slane %v1447, 1
      %v1480 = vrot.slane %v1448, 1
      %v1481 = vrot.slane %v1449, 1
      %v1482 = vrot.slane %v1450, 1
      %v1483 = vrot.slane %v1451, 1
      %v1484 = vrot.slane %v1452, 1
      %v1485 = vrot.slane %v1453, 1
      %v1486 = vsel %vm636, %v1484, %v1485
      %v1487 = vsel %vm636, %v1483, %v1484
      %v1488 = vsel %vm636, %v1482, %v1483
      %v1489 = vsel %vm636, %v1481, %v1482
      %v1490 = vsel %vm636, %v1480, %v1481
      %v1491 = vsel %vm636, %v1479, %v1480
      %v1492 = vsel %vm636, %v1478, %v1479
      %v1493 = vsel %vm636, %v1477, %v1478
      %v1494 = vsel %vm636, %v1476, %v1477
      %v1495 = vsel %vm636, %v1475, %v1476
      %v1496 = vsel %vm636, %v1474, %v1475
      %v1497 = vsel %vm636, %v1473, %v1474
      %v1498 = vsel %vm636, %v1472, %v1473
      %v1499 = vsel %vm636, %v1471, %v1472
      %v1500 = vsel %vm636, %v1470, %v1471
      %v1501 = vsel %vm636, %v1469, %v1470
      %v1502 = vsel %vm636, %v1468, %v1469
      %v1503 = vsel %vm636, %v1467, %v1468
      %v1504 = vsel %vm636, %v1466, %v1467
      %v1505 = vsel %vm636, %v1465, %v1466
      %v1506 = vsel %vm636, %v1464, %v1465
      %v1507 = vsel %vm636, %v1463, %v1464
      %v1508 = vsel %vm636, %v1462, %v1463
      %v1509 = vsel %vm636, %v1461, %v1462
      %v1510 = vsel %vm636, %v1460, %v1461
      %v1511 = vsel %vm636, %v1459, %v1460
      %v1512 = vsel %vm636, %v1458, %v1459
      %v1513 = vsel %vm636, %v1457, %v1458
      %v1514 = vsel %vm636, %v1456, %v1457
      %v1515 = vsel %vm636, %v1455, %v1456
      %v1516 = vsel %vm636, %v1454, %v1455
      %v1517 = vsel %vm636, %v1485, %v1454
      %v1518 = vmax.f32 %v1422, %v1516
      %v1519 = vmax.f32 %v1423, %v1515
      %v1520 = vmax.f32 %v1424, %v1514
      %v1521 = vmax.f32 %v1425, %v1513
      %v1522 = vmax.f32 %v1426, %v1512
      %v1523 = vmax.f32 %v1427, %v1511
      %v1524 = vmax.f32 %v1428, %v1510
      %v1525 = vmax.f32 %v1429, %v1509
      %v1526 = vmax.f32 %v1430, %v1508
      %v1527 = vmax.f32 %v1431, %v1507
      %v1528 = vmax.f32 %v1432, %v1506
      %v1529 = vmax.f32 %v1433, %v1505
      %v1530 = vmax.f32 %v1434, %v1504
      %v1531 = vmax.f32 %v1435, %v1503
      %v1532 = vmax.f32 %v1436, %v1502
      %v1533 = vmax.f32 %v1437, %v1501
      %v1534 = vmax.f32 %v1438, %v1500
      %v1535 = vmax.f32 %v1439, %v1499
      %v1536 = vmax.f32 %v1440, %v1498
      %v1537 = vmax.f32 %v1441, %v1497
      %v1538 = vmax.f32 %v1442, %v1496
      %v1539 = vmax.f32 %v1443, %v1495
      %v1540 = vmax.f32 %v1444, %v1494
      %v1541 = vmax.f32 %v1445, %v1493
      %v1542 = vmax.f32 %v1446, %v1492
      %v1543 = vmax.f32 %v1447, %v1491
      %v1544 = vmax.f32 %v1448, %v1490
      %v1545 = vmax.f32 %v1449, %v1489
      %v1546 = vmax.f32 %v1450, %v1488
      %v1547 = vmax.f32 %v1451, %v1487
      %v1548 = vmax.f32 %v1452, %v1486
      %v1549 = vmax.f32 %v1453, %v1517
      %1550 = vrot.lane.b32.xlu0 %v1518, 120
      %v1551 = vpop.permute.xlu0 %1550
      %1552 = vrot.lane.b32.xlu0 %v1519, 120
      %v1553 = vpop.permute.xlu0 %1552
      %1554 = vrot.lane.b32.xlu0 %v1520, 120
      %v1555 = vpop.permute.xlu0 %1554
      %1556 = vrot.lane.b32.xlu0 %v1521, 120
      %v1557 = vpop.permute.xlu0 %1556
      %1558 = vrot.lane.b32.xlu0 %v1522, 120
      %v1559 = vpop.permute.xlu0 %1558
      %1560 = vrot.lane.b32.xlu0 %v1523, 120
      %v1561 = vpop.permute.xlu0 %1560
      %1562 = vrot.lane.b32.xlu0 %v1524, 120
      %v1563 = vpop.permute.xlu0 %1562
      %1564 = vrot.lane.b32.xlu0 %v1525, 120
      %v1565 = vpop.permute.xlu0 %1564
      %1566 = vrot.lane.b32.xlu0 %v1526, 120
      %v1567 = vpop.permute.xlu0 %1566
      %1568 = vrot.lane.b32.xlu0 %v1527, 120
      %v1569 = vpop.permute.xlu0 %1568
      %1570 = vrot.lane.b32.xlu0 %v1528, 120
      %v1571 = vpop.permute.xlu0 %1570
      %1572 = vrot.lane.b32.xlu0 %v1529, 120
      %v1573 = vpop.permute.xlu0 %1572
      %1574 = vrot.lane.b32.xlu0 %v1530, 120
      %v1575 = vpop.permute.xlu0 %1574
      %1576 = vrot.lane.b32.xlu0 %v1531, 120
      %v1577 = vpop.permute.xlu0 %1576
      %1578 = vrot.lane.b32.xlu0 %v1532, 120
      %v1579 = vpop.permute.xlu0 %1578
      %1580 = vrot.lane.b32.xlu0 %v1533, 120
      %v1581 = vpop.permute.xlu0 %1580
      %1582 = vrot.lane.b32.xlu0 %v1534, 120
      %v1583 = vpop.permute.xlu0 %1582
      %1584 = vrot.lane.b32.xlu0 %v1535, 120
      %v1585 = vpop.permute.xlu0 %1584
      %1586 = vrot.lane.b32.xlu0 %v1536, 120
      %v1587 = vpop.permute.xlu0 %1586
      %1588 = vrot.lane.b32.xlu0 %v1537, 120
      %v1589 = vpop.permute.xlu0 %1588
      %1590 = vrot.lane.b32.xlu0 %v1538, 120
      %v1591 = vpop.permute.xlu0 %1590
      %1592 = vrot.lane.b32.xlu0 %v1539, 120
      %v1593 = vpop.permute.xlu0 %1592
      %1594 = vrot.lane.b32.xlu0 %v1540, 120
      %v1595 = vpop.permute.xlu0 %1594
      %1596 = vrot.lane.b32.xlu0 %v1541, 120
      %v1597 = vpop.permute.xlu0 %1596
      %1598 = vrot.lane.b32.xlu0 %v1542, 120
      %v1599 = vpop.permute.xlu0 %1598
      %1600 = vrot.lane.b32.xlu0 %v1543, 120
      %v1601 = vpop.permute.xlu0 %1600
      %1602 = vrot.lane.b32.xlu0 %v1544, 120
      %v1603 = vpop.permute.xlu0 %1602
      %1604 = vrot.lane.b32.xlu0 %v1545, 120
      %v1605 = vpop.permute.xlu0 %1604
      %1606 = vrot.lane.b32.xlu0 %v1546, 120
      %v1607 = vpop.permute.xlu0 %1606
      %1608 = vrot.lane.b32.xlu0 %v1547, 120
      %v1609 = vpop.permute.xlu0 %1608
      %1610 = vrot.lane.b32.xlu0 %v1548, 120
      %v1611 = vpop.permute.xlu0 %1610
      %1612 = vrot.lane.b32.xlu0 %v1549, 120
      %v1613 = vpop.permute.xlu0 %1612
      %v1614 = vmax.f32 %v1518, %v1551
      %v1615 = vmax.f32 %v1519, %v1553
      %v1616 = vmax.f32 %v1520, %v1555
      %v1617 = vmax.f32 %v1521, %v1557
      %v1618 = vmax.f32 %v1522, %v1559
      %v1619 = vmax.f32 %v1523, %v1561
      %v1620 = vmax.f32 %v1524, %v1563
      %v1621 = vmax.f32 %v1525, %v1565
      %v1622 = vmax.f32 %v1526, %v1567
      %v1623 = vmax.f32 %v1527, %v1569
      %v1624 = vmax.f32 %v1528, %v1571
      %v1625 = vmax.f32 %v1529, %v1573
      %v1626 = vmax.f32 %v1530, %v1575
      %v1627 = vmax.f32 %v1531, %v1577
      %v1628 = vmax.f32 %v1532, %v1579
      %v1629 = vmax.f32 %v1533, %v1581
      %v1630 = vmax.f32 %v1534, %v1583
      %v1631 = vmax.f32 %v1535, %v1585
      %v1632 = vmax.f32 %v1536, %v1587
      %v1633 = vmax.f32 %v1537, %v1589
      %v1634 = vmax.f32 %v1538, %v1591
      %v1635 = vmax.f32 %v1539, %v1593
      %v1636 = vmax.f32 %v1540, %v1595
      %v1637 = vmax.f32 %v1541, %v1597
      %v1638 = vmax.f32 %v1542, %v1599
      %v1639 = vmax.f32 %v1543, %v1601
      %v1640 = vmax.f32 %v1544, %v1603
      %v1641 = vmax.f32 %v1545, %v1605
      %v1642 = vmax.f32 %v1546, %v1607
      %v1643 = vmax.f32 %v1547, %v1609
      %v1644 = vmax.f32 %v1548, %v1611
      %v1645 = vmax.f32 %v1549, %v1613
      %vm1646 = vcmp.ge.s32.totalorder %v315, 2
      %vm1647 = vcmp.ge.s32.totalorder %v316, 2
      %vm1648 = vcmp.ge.s32.totalorder %v317, 2
      %vm1649 = vcmp.ge.s32.totalorder %v318, 2
      %vm1650 = vcmp.ge.s32.totalorder %v319, 2
      %vm1651 = vcmp.ge.s32.totalorder %v320, 2
      %vm1652 = vcmp.ge.s32.totalorder %v321, 2
      %vm1653 = vcmp.ge.s32.totalorder %v322, 2
      %vm1654 = vcmp.ge.s32.totalorder %v323, 2
      %vm1655 = vcmp.ge.s32.totalorder %v324, 2
      %vm1656 = vcmp.ge.s32.totalorder %v325, 2
      %vm1657 = vcmp.ge.s32.totalorder %v326, 2
      %vm1658 = vcmp.ge.s32.totalorder %v327, 2
      %vm1659 = vcmp.ge.s32.totalorder %v328, 2
      %vm1660 = vcmp.ge.s32.totalorder %v329, 2
      %vm1661 = vcmp.ge.s32.totalorder %v330, 2
      %vm1662 = vcmp.ge.s32.totalorder %v331, 2
      %vm1663 = vcmp.ge.s32.totalorder %v332, 2
      %vm1664 = vcmp.ge.s32.totalorder %v333, 2
      %vm1665 = vcmp.ge.s32.totalorder %v334, 2
      %vm1666 = vcmp.ge.s32.totalorder %v335, 2
      %vm1667 = vcmp.ge.s32.totalorder %v336, 2
      %vm1668 = vcmp.ge.s32.totalorder %v337, 2
      %vm1669 = vcmp.ge.s32.totalorder %v338, 2
      %vm1670 = vcmp.ge.s32.totalorder %v339, 2
      %vm1671 = vcmp.ge.s32.totalorder %v340, 2
      %vm1672 = vcmp.ge.s32.totalorder %v341, 2
      %vm1673 = vcmp.ge.s32.totalorder %v342, 2
      %vm1674 = vcmp.ge.s32.totalorder %v343, 2
      %vm1675 = vcmp.ge.s32.totalorder %v344, 2
      %vm1676 = vcmp.ge.s32.totalorder %v345, 2
      %vm1677 = vcmp.ge.s32.totalorder %v346, 2
      %v1678 = vrot.slane %v1614, 6
      %v1679 = vrot.slane %v1615, 6
      %v1680 = vrot.slane %v1616, 6
      %v1681 = vrot.slane %v1617, 6
      %v1682 = vrot.slane %v1618, 6
      %v1683 = vrot.slane %v1619, 6
      %v1684 = vrot.slane %v1620, 6
      %v1685 = vrot.slane %v1621, 6
      %v1686 = vrot.slane %v1622, 6
      %v1687 = vrot.slane %v1623, 6
      %v1688 = vrot.slane %v1624, 6
      %v1689 = vrot.slane %v1625, 6
      %v1690 = vrot.slane %v1626, 6
      %v1691 = vrot.slane %v1627, 6
      %v1692 = vrot.slane %v1628, 6
      %v1693 = vrot.slane %v1629, 6
      %v1694 = vrot.slane %v1630, 6
      %v1695 = vrot.slane %v1631, 6
      %v1696 = vrot.slane %v1632, 6
      %v1697 = vrot.slane %v1633, 6
      %v1698 = vrot.slane %v1634, 6
      %v1699 = vrot.slane %v1635, 6
      %v1700 = vrot.slane %v1636, 6
      %v1701 = vrot.slane %v1637, 6
      %v1702 = vrot.slane %v1638, 6
      %v1703 = vrot.slane %v1639, 6
      %v1704 = vrot.slane %v1640, 6
      %v1705 = vrot.slane %v1641, 6
      %v1706 = vrot.slane %v1642, 6
      %v1707 = vrot.slane %v1643, 6
      %v1708 = vrot.slane %v1644, 6
      %v1709 = vrot.slane %v1645, 6
      %vm1710 = vcmp.lt.s32.totalorder %v283, 2
      %v1711 = vsel %vm1710, %v1708, %v1709
      %v1712 = vsel %vm1710, %v1707, %v1708
      %v1713 = vsel %vm1710, %v1706, %v1707
      %v1714 = vsel %vm1710, %v1705, %v1706
      %v1715 = vsel %vm1710, %v1704, %v1705
      %v1716 = vsel %vm1710, %v1703, %v1704
      %v1717 = vsel %vm1710, %v1702, %v1703
      %v1718 = vsel %vm1710, %v1701, %v1702
      %v1719 = vsel %vm1710, %v1700, %v1701
      %v1720 = vsel %vm1710, %v1699, %v1700
      %v1721 = vsel %vm1710, %v1698, %v1699
      %v1722 = vsel %vm1710, %v1697, %v1698
      %v1723 = vsel %vm1710, %v1696, %v1697
      %v1724 = vsel %vm1710, %v1695, %v1696
      %v1725 = vsel %vm1710, %v1694, %v1695
      %v1726 = vsel %vm1710, %v1693, %v1694
      %v1727 = vsel %vm1710, %v1692, %v1693
      %v1728 = vsel %vm1710, %v1691, %v1692
      %v1729 = vsel %vm1710, %v1690, %v1691
      %v1730 = vsel %vm1710, %v1689, %v1690
      %v1731 = vsel %vm1710, %v1688, %v1689
      %v1732 = vsel %vm1710, %v1687, %v1688
      %v1733 = vsel %vm1710, %v1686, %v1687
      %v1734 = vsel %vm1710, %v1685, %v1686
      %v1735 = vsel %vm1710, %v1684, %v1685
      %v1736 = vsel %vm1710, %v1683, %v1684
      %v1737 = vsel %vm1710, %v1682, %v1683
      %v1738 = vsel %vm1710, %v1681, %v1682
      %v1739 = vsel %vm1710, %v1680, %v1681
      %v1740 = vsel %vm1710, %v1679, %v1680
      %v1741 = vsel %vm1710, %v1678, %v1679
      %v1742 = vsel %vm1710, %v1709, %v1678
      %v1743 = vsel %vm1646, 1, 0
      %v1744 = vsel %vm1647, 1, 0
      %v1745 = vsel %vm1648, 1, 0
      %v1746 = vsel %vm1649, 1, 0
      %v1747 = vsel %vm1650, 1, 0
      %v1748 = vsel %vm1651, 1, 0
      %v1749 = vsel %vm1652, 1, 0
      %v1750 = vsel %vm1653, 1, 0
      %v1751 = vsel %vm1654, 1, 0
      %v1752 = vsel %vm1655, 1, 0
      %v1753 = vsel %vm1656, 1, 0
      %v1754 = vsel %vm1657, 1, 0
      %v1755 = vsel %vm1658, 1, 0
      %v1756 = vsel %vm1659, 1, 0
      %v1757 = vsel %vm1660, 1, 0
      %v1758 = vsel %vm1661, 1, 0
      %v1759 = vsel %vm1662, 1, 0
      %v1760 = vsel %vm1663, 1, 0
      %v1761 = vsel %vm1664, 1, 0
      %v1762 = vsel %vm1665, 1, 0
      %v1763 = vsel %vm1666, 1, 0
      %v1764 = vsel %vm1667, 1, 0
      %v1765 = vsel %vm1668, 1, 0
      %v1766 = vsel %vm1669, 1, 0
      %v1767 = vsel %vm1670, 1, 0
      %v1768 = vsel %vm1671, 1, 0
      %v1769 = vsel %vm1672, 1, 0
      %v1770 = vsel %vm1673, 1, 0
      %v1771 = vsel %vm1674, 1, 0
      %v1772 = vsel %vm1675, 1, 0
      %v1773 = vsel %vm1676, 1, 0
      %v1774 = vsel %vm1677, 1, 0
      %vm1775 = vcmp.eq.s32.totalorder %v1743, 1
      %vm1776 = vcmp.eq.s32.totalorder %v1744, 1
      %vm1777 = vcmp.eq.s32.totalorder %v1745, 1
      %vm1778 = vcmp.eq.s32.totalorder %v1746, 1
      %vm1779 = vcmp.eq.s32.totalorder %v1747, 1
      %vm1780 = vcmp.eq.s32.totalorder %v1748, 1
      %vm1781 = vcmp.eq.s32.totalorder %v1749, 1
      %vm1782 = vcmp.eq.s32.totalorder %v1750, 1
      %vm1783 = vcmp.eq.s32.totalorder %v1751, 1
      %vm1784 = vcmp.eq.s32.totalorder %v1752, 1
      %vm1785 = vcmp.eq.s32.totalorder %v1753, 1
      %vm1786 = vcmp.eq.s32.totalorder %v1754, 1
      %vm1787 = vcmp.eq.s32.totalorder %v1755, 1
      %vm1788 = vcmp.eq.s32.totalorder %v1756, 1
      %vm1789 = vcmp.eq.s32.totalorder %v1757, 1
      %vm1790 = vcmp.eq.s32.totalorder %v1758, 1
      %vm1791 = vcmp.eq.s32.totalorder %v1759, 1
      %vm1792 = vcmp.eq.s32.totalorder %v1760, 1
      %vm1793 = vcmp.eq.s32.totalorder %v1761, 1
      %vm1794 = vcmp.eq.s32.totalorder %v1762, 1
      %vm1795 = vcmp.eq.s32.totalorder %v1763, 1
      %vm1796 = vcmp.eq.s32.totalorder %v1764, 1
      %vm1797 = vcmp.eq.s32.totalorder %v1765, 1
      %vm1798 = vcmp.eq.s32.totalorder %v1766, 1
      %vm1799 = vcmp.eq.s32.totalorder %v1767, 1
      %vm1800 = vcmp.eq.s32.totalorder %v1768, 1
      %vm1801 = vcmp.eq.s32.totalorder %v1769, 1
      %vm1802 = vcmp.eq.s32.totalorder %v1770, 1
      %vm1803 = vcmp.eq.s32.totalorder %v1771, 1
      %vm1804 = vcmp.eq.s32.totalorder %v1772, 1
      %vm1805 = vcmp.eq.s32.totalorder %v1773, 1
      %vm1806 = vcmp.eq.s32.totalorder %v1774, 1
      %v1807 = vsel %vm1775, %v1742, 0.0
      %v1808 = vsel %vm1776, %v1741, 0.0
      %v1809 = vsel %vm1777, %v1740, 0.0
      %v1810 = vsel %vm1778, %v1739, 0.0
      %v1811 = vsel %vm1779, %v1738, 0.0
      %v1812 = vsel %vm1780, %v1737, 0.0
      %v1813 = vsel %vm1781, %v1736, 0.0
      %v1814 = vsel %vm1782, %v1735, 0.0
      %v1815 = vsel %vm1783, %v1734, 0.0
      %v1816 = vsel %vm1784, %v1733, 0.0
      %v1817 = vsel %vm1785, %v1732, 0.0
      %v1818 = vsel %vm1786, %v1731, 0.0
      %v1819 = vsel %vm1787, %v1730, 0.0
      %v1820 = vsel %vm1788, %v1729, 0.0
      %v1821 = vsel %vm1789, %v1728, 0.0
      %v1822 = vsel %vm1790, %v1727, 0.0
      %v1823 = vsel %vm1791, %v1726, 0.0
      %v1824 = vsel %vm1792, %v1725, 0.0
      %v1825 = vsel %vm1793, %v1724, 0.0
      %v1826 = vsel %vm1794, %v1723, 0.0
      %v1827 = vsel %vm1795, %v1722, 0.0
      %v1828 = vsel %vm1796, %v1721, 0.0
      %v1829 = vsel %vm1797, %v1720, 0.0
      %v1830 = vsel %vm1798, %v1719, 0.0
      %v1831 = vsel %vm1799, %v1718, 0.0
      %v1832 = vsel %vm1800, %v1717, 0.0
      %v1833 = vsel %vm1801, %v1716, 0.0
      %v1834 = vsel %vm1802, %v1715, 0.0
      %v1835 = vsel %vm1803, %v1714, 0.0
      %v1836 = vsel %vm1804, %v1713, 0.0
      %v1837 = vsel %vm1805, %v1712, 0.0
      %v1838 = vsel %vm1806, %v1711, 0.0
      %vm1839 = vcmp.lt.s32.totalorder %v315, 14
      %vm1840 = vcmp.lt.s32.totalorder %v316, 14
      %vm1841 = vcmp.lt.s32.totalorder %v317, 14
      %vm1842 = vcmp.lt.s32.totalorder %v318, 14
      %vm1843 = vcmp.lt.s32.totalorder %v319, 14
      %vm1844 = vcmp.lt.s32.totalorder %v320, 14
      %vm1845 = vcmp.lt.s32.totalorder %v321, 14
      %vm1846 = vcmp.lt.s32.totalorder %v322, 14
      %vm1847 = vcmp.lt.s32.totalorder %v323, 14
      %vm1848 = vcmp.lt.s32.totalorder %v324, 14
      %vm1849 = vcmp.lt.s32.totalorder %v325, 14
      %vm1850 = vcmp.lt.s32.totalorder %v326, 14
      %vm1851 = vcmp.lt.s32.totalorder %v327, 14
      %vm1852 = vcmp.lt.s32.totalorder %v328, 14
      %vm1853 = vcmp.lt.s32.totalorder %v329, 14
      %vm1854 = vcmp.lt.s32.totalorder %v330, 14
      %vm1855 = vcmp.lt.s32.totalorder %v331, 14
      %vm1856 = vcmp.lt.s32.totalorder %v332, 14
      %vm1857 = vcmp.lt.s32.totalorder %v333, 14
      %vm1858 = vcmp.lt.s32.totalorder %v334, 14
      %vm1859 = vcmp.lt.s32.totalorder %v335, 14
      %vm1860 = vcmp.lt.s32.totalorder %v336, 14
      %vm1861 = vcmp.lt.s32.totalorder %v337, 14
      %vm1862 = vcmp.lt.s32.totalorder %v338, 14
      %vm1863 = vcmp.lt.s32.totalorder %v339, 14
      %vm1864 = vcmp.lt.s32.totalorder %v340, 14
      %vm1865 = vcmp.lt.s32.totalorder %v341, 14
      %vm1866 = vcmp.lt.s32.totalorder %v342, 14
      %vm1867 = vcmp.lt.s32.totalorder %v343, 14
      %vm1868 = vcmp.lt.s32.totalorder %v344, 14
      %vm1869 = vcmp.lt.s32.totalorder %v345, 14
      %vm1870 = vcmp.lt.s32.totalorder %v346, 14
      %v1871 = vrot.slane %v1614, 2
      %v1872 = vrot.slane %v1615, 2
      %v1873 = vrot.slane %v1616, 2
      %v1874 = vrot.slane %v1617, 2
      %v1875 = vrot.slane %v1618, 2
      %v1876 = vrot.slane %v1619, 2
      %v1877 = vrot.slane %v1620, 2
      %v1878 = vrot.slane %v1621, 2
      %v1879 = vrot.slane %v1622, 2
      %v1880 = vrot.slane %v1623, 2
      %v1881 = vrot.slane %v1624, 2
      %v1882 = vrot.slane %v1625, 2
      %v1883 = vrot.slane %v1626, 2
      %v1884 = vrot.slane %v1627, 2
      %v1885 = vrot.slane %v1628, 2
      %v1886 = vrot.slane %v1629, 2
      %v1887 = vrot.slane %v1630, 2
      %v1888 = vrot.slane %v1631, 2
      %v1889 = vrot.slane %v1632, 2
      %v1890 = vrot.slane %v1633, 2
      %v1891 = vrot.slane %v1634, 2
      %v1892 = vrot.slane %v1635, 2
      %v1893 = vrot.slane %v1636, 2
      %v1894 = vrot.slane %v1637, 2
      %v1895 = vrot.slane %v1638, 2
      %v1896 = vrot.slane %v1639, 2
      %v1897 = vrot.slane %v1640, 2
      %v1898 = vrot.slane %v1641, 2
      %v1899 = vrot.slane %v1642, 2
      %v1900 = vrot.slane %v1643, 2
      %v1901 = vrot.slane %v1644, 2
      %v1902 = vrot.slane %v1645, 2
      %vm1903 = vcmp.lt.s32.totalorder %v283, 6
      %v1904 = vsel %vm1903, %v1901, %v1902
      %v1905 = vsel %vm1903, %v1900, %v1901
      %v1906 = vsel %vm1903, %v1899, %v1900
      %v1907 = vsel %vm1903, %v1898, %v1899
      %v1908 = vsel %vm1903, %v1897, %v1898
      %v1909 = vsel %vm1903, %v1896, %v1897
      %v1910 = vsel %vm1903, %v1895, %v1896
      %v1911 = vsel %vm1903, %v1894, %v1895
      %v1912 = vsel %vm1903, %v1893, %v1894
      %v1913 = vsel %vm1903, %v1892, %v1893
      %v1914 = vsel %vm1903, %v1891, %v1892
      %v1915 = vsel %vm1903, %v1890, %v1891
      %v1916 = vsel %vm1903, %v1889, %v1890
      %v1917 = vsel %vm1903, %v1888, %v1889
      %v1918 = vsel %vm1903, %v1887, %v1888
      %v1919 = vsel %vm1903, %v1886, %v1887
      %v1920 = vsel %vm1903, %v1885, %v1886
      %v1921 = vsel %vm1903, %v1884, %v1885
      %v1922 = vsel %vm1903, %v1883, %v1884
      %v1923 = vsel %vm1903, %v1882, %v1883
      %v1924 = vsel %vm1903, %v1881, %v1882
      %v1925 = vsel %vm1903, %v1880, %v1881
      %v1926 = vsel %vm1903, %v1879, %v1880
      %v1927 = vsel %vm1903, %v1878, %v1879
      %v1928 = vsel %vm1903, %v1877, %v1878
      %v1929 = vsel %vm1903, %v1876, %v1877
      %v1930 = vsel %vm1903, %v1875, %v1876
      %v1931 = vsel %vm1903, %v1874, %v1875
      %v1932 = vsel %vm1903, %v1873, %v1874
      %v1933 = vsel %vm1903, %v1872, %v1873
      %v1934 = vsel %vm1903, %v1871, %v1872
      %v1935 = vsel %vm1903, %v1902, %v1871
      %v1936 = vsel %vm1839, 1, 0
      %v1937 = vsel %vm1840, 1, 0
      %v1938 = vsel %vm1841, 1, 0
      %v1939 = vsel %vm1842, 1, 0
      %v1940 = vsel %vm1843, 1, 0
      %v1941 = vsel %vm1844, 1, 0
      %v1942 = vsel %vm1845, 1, 0
      %v1943 = vsel %vm1846, 1, 0
      %v1944 = vsel %vm1847, 1, 0
      %v1945 = vsel %vm1848, 1, 0
      %v1946 = vsel %vm1849, 1, 0
      %v1947 = vsel %vm1850, 1, 0
      %v1948 = vsel %vm1851, 1, 0
      %v1949 = vsel %vm1852, 1, 0
      %v1950 = vsel %vm1853, 1, 0
      %v1951 = vsel %vm1854, 1, 0
      %v1952 = vsel %vm1855, 1, 0
      %v1953 = vsel %vm1856, 1, 0
      %v1954 = vsel %vm1857, 1, 0
      %v1955 = vsel %vm1858, 1, 0
      %v1956 = vsel %vm1859, 1, 0
      %v1957 = vsel %vm1860, 1, 0
      %v1958 = vsel %vm1861, 1, 0
      %v1959 = vsel %vm1862, 1, 0
      %v1960 = vsel %vm1863, 1, 0
      %v1961 = vsel %vm1864, 1, 0
      %v1962 = vsel %vm1865, 1, 0
      %v1963 = vsel %vm1866, 1, 0
      %v1964 = vsel %vm1867, 1, 0
      %v1965 = vsel %vm1868, 1, 0
      %v1966 = vsel %vm1869, 1, 0
      %v1967 = vsel %vm1870, 1, 0
      %vm1968 = vcmp.eq.s32.totalorder %v1936, 1
      %vm1969 = vcmp.eq.s32.totalorder %v1937, 1
      %vm1970 = vcmp.eq.s32.totalorder %v1938, 1
      %vm1971 = vcmp.eq.s32.totalorder %v1939, 1
      %vm1972 = vcmp.eq.s32.totalorder %v1940, 1
      %vm1973 = vcmp.eq.s32.totalorder %v1941, 1
      %vm1974 = vcmp.eq.s32.totalorder %v1942, 1
      %vm1975 = vcmp.eq.s32.totalorder %v1943, 1
      %vm1976 = vcmp.eq.s32.totalorder %v1944, 1
      %vm1977 = vcmp.eq.s32.totalorder %v1945, 1
      %vm1978 = vcmp.eq.s32.totalorder %v1946, 1
      %vm1979 = vcmp.eq.s32.totalorder %v1947, 1
      %vm1980 = vcmp.eq.s32.totalorder %v1948, 1
      %vm1981 = vcmp.eq.s32.totalorder %v1949, 1
      %vm1982 = vcmp.eq.s32.totalorder %v1950, 1
      %vm1983 = vcmp.eq.s32.totalorder %v1951, 1
      %vm1984 = vcmp.eq.s32.totalorder %v1952, 1
      %vm1985 = vcmp.eq.s32.totalorder %v1953, 1
      %vm1986 = vcmp.eq.s32.totalorder %v1954, 1
      %vm1987 = vcmp.eq.s32.totalorder %v1955, 1
      %vm1988 = vcmp.eq.s32.totalorder %v1956, 1
      %vm1989 = vcmp.eq.s32.totalorder %v1957, 1
      %vm1990 = vcmp.eq.s32.totalorder %v1958, 1
      %vm1991 = vcmp.eq.s32.totalorder %v1959, 1
      %vm1992 = vcmp.eq.s32.totalorder %v1960, 1
      %vm1993 = vcmp.eq.s32.totalorder %v1961, 1
      %vm1994 = vcmp.eq.s32.totalorder %v1962, 1
      %vm1995 = vcmp.eq.s32.totalorder %v1963, 1
      %vm1996 = vcmp.eq.s32.totalorder %v1964, 1
      %vm1997 = vcmp.eq.s32.totalorder %v1965, 1
      %vm1998 = vcmp.eq.s32.totalorder %v1966, 1
      %vm1999 = vcmp.eq.s32.totalorder %v1967, 1
      %v2000 = vsel %vm1968, %v1934, 0.0
      %v2001 = vsel %vm1969, %v1933, 0.0
      %v2002 = vsel %vm1970, %v1932, 0.0
      %v2003 = vsel %vm1971, %v1931, 0.0
      %v2004 = vsel %vm1972, %v1930, 0.0
      %v2005 = vsel %vm1973, %v1929, 0.0
      %v2006 = vsel %vm1974, %v1928, 0.0
      %v2007 = vsel %vm1975, %v1927, 0.0
      %v2008 = vsel %vm1976, %v1926, 0.0
      %v2009 = vsel %vm1977, %v1925, 0.0
      %v2010 = vsel %vm1978, %v1924, 0.0
      %v2011 = vsel %vm1979, %v1923, 0.0
      %v2012 = vsel %vm1980, %v1922, 0.0
      %v2013 = vsel %vm1981, %v1921, 0.0
      %v2014 = vsel %vm1982, %v1920, 0.0
      %v2015 = vsel %vm1983, %v1919, 0.0
      %v2016 = vsel %vm1984, %v1918, 0.0
      %v2017 = vsel %vm1985, %v1917, 0.0
      %v2018 = vsel %vm1986, %v1916, 0.0
      %v2019 = vsel %vm1987, %v1915, 0.0
      %v2020 = vsel %vm1988, %v1914, 0.0
      %v2021 = vsel %vm1989, %v1913, 0.0
      %v2022 = vsel %vm1990, %v1912, 0.0
      %v2023 = vsel %vm1991, %v1911, 0.0
      %v2024 = vsel %vm1992, %v1910, 0.0
      %v2025 = vsel %vm1993, %v1909, 0.0
      %v2026 = vsel %vm1994, %v1908, 0.0
      %v2027 = vsel %vm1995, %v1907, 0.0
      %v2028 = vsel %vm1996, %v1906, 0.0
      %v2029 = vsel %vm1997, %v1905, 0.0
      %v2030 = vsel %vm1998, %v1904, 0.0
      %v2031 = vsel %vm1999, %v1935, 0.0
      %v2032 = vld [vmem:[%s3] sm:$0xff]
      %v2033 = vld [vmem:[%s3 + $0x8] sm:$0xff]
      %v2034 = vld [vmem:[%s3 + $0x10] sm:$0xff]
      %v2035 = vld [vmem:[%s3 + $0x18] sm:$0xff]
      %v2036 = vld [vmem:[%s3 + $0x20] sm:$0xff]
      %v2037 = vld [vmem:[%s3 + $0x28] sm:$0xff]
      %v2038 = vld [vmem:[%s3 + $0x30] sm:$0xff]
      %v2039 = vld [vmem:[%s3 + $0x38] sm:$0xff]
      %v2040 = vld [vmem:[%s3 + $0x40] sm:$0xff]
      %v2041 = vld [vmem:[%s3 + $0x48] sm:$0xff]
      %v2042 = vld [vmem:[%s3 + $0x50] sm:$0xff]
      %v2043 = vld [vmem:[%s3 + $0x58] sm:$0xff]
      %v2044 = vld [vmem:[%s3 + $0x60] sm:$0xff]
      %v2045 = vld [vmem:[%s3 + $0x68] sm:$0xff]
      %v2046 = vld [vmem:[%s3 + $0x70] sm:$0xff]
      %v2047 = vld [vmem:[%s3 + $0x78] sm:$0xff]
      %v2048 = vld [vmem:[%s3 + $0x80] sm:$0xff]
      %v2049 = vld [vmem:[%s3 + $0x88] sm:$0xff]
      %v2050 = vld [vmem:[%s3 + $0x90] sm:$0xff]
      %v2051 = vld [vmem:[%s3 + $0x98] sm:$0xff]
      %v2052 = vld [vmem:[%s3 + $0xa0] sm:$0xff]
      %v2053 = vld [vmem:[%s3 + $0xa8] sm:$0xff]
      %v2054 = vld [vmem:[%s3 + $0xb0] sm:$0xff]
      %v2055 = vld [vmem:[%s3 + $0xb8] sm:$0xff]
      %v2056 = vld [vmem:[%s3 + $0xc0] sm:$0xff]
      %v2057 = vld [vmem:[%s3 + $0xc8] sm:$0xff]
      %v2058 = vld [vmem:[%s3 + $0xd0] sm:$0xff]
      %v2059 = vld [vmem:[%s3 + $0xd8] sm:$0xff]
      %v2060 = vld [vmem:[%s3 + $0xe0] sm:$0xff]
      %v2061 = vld [vmem:[%s3 + $0xe8] sm:$0xff]
      %v2062 = vld [vmem:[%s3 + $0xf0] sm:$0xff]
      %v2063 = vld [vmem:[%s3 + $0xf8] sm:$0xff]
      %v2064 = vld [vmem:[%s3 + $0x100] sm:$0xff]
      %v2065 = vld [vmem:[%s3 + $0x108] sm:$0xff]
      %v2066 = vld [vmem:[%s3 + $0x110] sm:$0xff]
      %v2067 = vld [vmem:[%s3 + $0x118] sm:$0xff]
      %v2068 = vld [vmem:[%s3 + $0x120] sm:$0xff]
      %v2069 = vld [vmem:[%s3 + $0x128] sm:$0xff]
      %v2070 = vld [vmem:[%s3 + $0x130] sm:$0xff]
      %v2071 = vld [vmem:[%s3 + $0x138] sm:$0xff]
      %v2072 = vld [vmem:[%s3 + $0x140] sm:$0xff]
      %v2073 = vld [vmem:[%s3 + $0x148] sm:$0xff]
      %v2074 = vld [vmem:[%s3 + $0x150] sm:$0xff]
      %v2075 = vld [vmem:[%s3 + $0x158] sm:$0xff]
      %v2076 = vld [vmem:[%s3 + $0x160] sm:$0xff]
      %v2077 = vld [vmem:[%s3 + $0x168] sm:$0xff]
      %v2078 = vld [vmem:[%s3 + $0x170] sm:$0xff]
      %v2079 = vld [vmem:[%s3 + $0x178] sm:$0xff]
      %v2080 = vld [vmem:[%s4] sm:$0x1]
      %v2082 = vlaneseq
      %v2083 = vshrl.u32 %v2082, 7
      %v2084 = vsub.s32 0, %v2083
      %v2085 = vrot.slane %v2080, %v2084
      %2087 = vmatprep.subr.mxu0 0.0
      %2088 = vmatpush1.msra.mxu0 %v2047
      %2089 = vmatprep.subr.mxu0 0.0
      %2090 = vmatpush1.msra.mxu0 %v2046
      %2091 = vmatprep.subr.mxu0 0.0
      %2092 = vmatpush1.msra.mxu0 %v2045
      %2093 = vmatprep.subr.mxu0 0.0
      %2094 = vmatpush1.msra.mxu0 %v2044
      %2095 = vmatprep.subr.mxu0 0.0
      %2096 = vmatpush1.msra.mxu0 %v2043
      %2097 = vmatprep.subr.mxu0 0.0
      %2098 = vmatpush1.msra.mxu0 %v2042
      %2099 = vmatprep.subr.mxu0 0.0
      %2100 = vmatpush1.msra.mxu0 %v2041
      %2101 = vmatprep.subr.mxu0 0.0
      %2102 = vmatpush1.msra.mxu0 %v2040
      %2103 = vmatprep.subr.mxu0 0.0
      %2104 = vmatpush1.msra.mxu0 %v2039
      %2105 = vmatprep.subr.mxu0 0.0
      %2106 = vmatpush1.msra.mxu0 %v2038
      %2107 = vmatprep.subr.mxu0 0.0
      %2108 = vmatpush1.msra.mxu0 %v2037
      %2109 = vmatprep.subr.mxu0 0.0
      %2110 = vmatpush1.msra.mxu0 %v2036
      %2111 = vmatprep.subr.mxu0 0.0
      %2112 = vmatpush1.msra.mxu0 %v2035
      %2113 = vmatprep.subr.mxu0 0.0
      %2114 = vmatpush1.msra.mxu0 %v2034
      %2115 = vmatprep.subr.mxu0 0.0
      %2116 = vmatpush1.msra.mxu0 %v2033
      %2117 = vmatprep.subr.mxu0 0.0
      %2118 = vmatpush1.msra.mxu0 %v2032
      %2119 = vmatprep.subr.mxu0 0.0
      %2120 = vmatpush2.msra.mxu0 %v2063
      %2121 = vmatprep.subr.mxu0 0.0
      %2122 = vmatpush2.msra.mxu0 %v2062
      %2123 = vmatprep.subr.mxu0 0.0
      %2124 = vmatpush2.msra.mxu0 %v2061
      %2125 = vmatprep.subr.mxu0 0.0
      %2126 = vmatpush2.msra.mxu0 %v2060
      %2127 = vmatprep.subr.mxu0 0.0
      %2128 = vmatpush2.msra.mxu0 %v2059
      %2129 = vmatprep.subr.mxu0 0.0
      %2130 = vmatpush2.msra.mxu0 %v2058
      %2131 = vmatprep.subr.mxu0 0.0
      %2132 = vmatpush2.msra.mxu0 %v2057
      %2133 = vmatprep.subr.mxu0 0.0
      %2134 = vmatpush2.msra.mxu0 %v2056
      %2135 = vmatprep.subr.mxu0 0.0
      %2136 = vmatpush2.msra.mxu0 %v2055
      %2137 = vmatprep.subr.mxu0 0.0
      %2138 = vmatpush2.msra.mxu0 %v2054
      %2139 = vmatprep.subr.mxu0 0.0
      %2140 = vmatpush2.msra.mxu0 %v2053
      %2141 = vmatprep.subr.mxu0 0.0
      %2142 = vmatpush2.msra.mxu0 %v2052
      %2143 = vmatprep.subr.mxu0 0.0
      %2144 = vmatpush2.msra.mxu0 %v2051
      %2145 = vmatprep.subr.mxu0 0.0
      %2146 = vmatpush2.msra.mxu0 %v2050
      %2147 = vmatprep.subr.mxu0 0.0
      %2148 = vmatpush2.msra.mxu0 %v2049
      %2149 = vmatprep.subr.mxu0 0.0
      %2150 = vmatpush2.msra.mxu0 %v2048
      %2151 = vmatprep.mubr.f32.mxu0 %v1614
      %2152 = vmatmul.mubr.f32.gmra.mxu0 %v1807
      %v2153 = vpop.f32.mrf.mxu0
      %v2154 = vadd.f32 %v2085, %v2153
      %v2155 = vpop.f32.mrf.mxu0
      %2156 = vmatprep.mubr.f32.mxu0 %v1615
      %2157 = vmatmul.mubr.f32.gmra.mxu0 %v1808
      %v2158 = vpop.f32.mrf.mxu0
      %v2159 = vadd.f32 %v2085, %v2158
      %v2160 = vpop.f32.mrf.mxu0
      %2161 = vmatprep.mubr.f32.mxu0 %v1616
      %2162 = vmatmul.mubr.f32.gmra.mxu0 %v1809
      %v2163 = vpop.f32.mrf.mxu0
      %v2164 = vadd.f32 %v2085, %v2163
      %v2165 = vpop.f32.mrf.mxu0
      %2166 = vmatprep.mubr.f32.mxu0 %v1617
      %2167 = vmatmul.mubr.f32.gmra.mxu0 %v1810
      %v2168 = vpop.f32.mrf.mxu0
      %v2169 = vadd.f32 %v2085, %v2168
      %v2170 = vpop.f32.mrf.mxu0
      %2171 = vmatprep.mubr.f32.mxu0 %v1618
      %2172 = vmatmul.mubr.f32.gmra.mxu0 %v1811
      %v2173 = vpop.f32.mrf.mxu0
      %v2174 = vadd.f32 %v2085, %v2173
      %v2175 = vpop.f32.mrf.mxu0
      %2176 = vmatprep.mubr.f32.mxu0 %v1619
      %2177 = vmatmul.mubr.f32.gmra.mxu0 %v1812
      %v2178 = vpop.f32.mrf.mxu0
      %v2179 = vadd.f32 %v2085, %v2178
      %v2180 = vpop.f32.mrf.mxu0
      %2181 = vmatprep.mubr.f32.mxu0 %v1620
      %2182 = vmatmul.mubr.f32.gmra.mxu0 %v1813
      %v2183 = vpop.f32.mrf.mxu0
      %v2184 = vadd.f32 %v2085, %v2183
      %v2185 = vpop.f32.mrf.mxu0
      %2186 = vmatprep.mubr.f32.mxu0 %v1621
      %2187 = vmatmul.mubr.f32.gmra.mxu0 %v1814
      %v2188 = vpop.f32.mrf.mxu0
      %v2189 = vadd.f32 %v2085, %v2188
      %v2190 = vpop.f32.mrf.mxu0
      %2191 = vmatprep.mubr.f32.mxu0 %v1622
      %2192 = vmatmul.mubr.f32.gmra.mxu0 %v1815
      %v2193 = vpop.f32.mrf.mxu0
      %v2194 = vadd.f32 %v2085, %v2193
      %v2195 = vpop.f32.mrf.mxu0
      %2196 = vmatprep.mubr.f32.mxu0 %v1623
      %2197 = vmatmul.mubr.f32.gmra.mxu0 %v1816
      %v2198 = vpop.f32.mrf.mxu0
      %v2199 = vadd.f32 %v2085, %v2198
      %v2200 = vpop.f32.mrf.mxu0
      %2201 = vmatprep.mubr.f32.mxu0 %v1624
      %2202 = vmatmul.mubr.f32.gmra.mxu0 %v1817
      %v2203 = vpop.f32.mrf.mxu0
      %v2204 = vadd.f32 %v2085, %v2203
      %v2205 = vpop.f32.mrf.mxu0
      %2206 = vmatprep.mubr.f32.mxu0 %v1625
      %2207 = vmatmul.mubr.f32.gmra.mxu0 %v1818
      %v2208 = vpop.f32.mrf.mxu0
      %v2209 = vadd.f32 %v2085, %v2208
      %v2210 = vpop.f32.mrf.mxu0
      %2211 = vmatprep.mubr.f32.mxu0 %v1626
      %2212 = vmatmul.mubr.f32.gmra.mxu0 %v1819
      %v2213 = vpop.f32.mrf.mxu0
      %v2214 = vadd.f32 %v2085, %v2213
      %v2215 = vpop.f32.mrf.mxu0
      %2216 = vmatprep.mubr.f32.mxu0 %v1627
      %2217 = vmatmul.mubr.f32.gmra.mxu0 %v1820
      %v2218 = vpop.f32.mrf.mxu0
      %v2219 = vadd.f32 %v2085, %v2218
      %v2220 = vpop.f32.mrf.mxu0
      %2221 = vmatprep.mubr.f32.mxu0 %v1628
      %2222 = vmatmul.mubr.f32.gmra.mxu0 %v1821
      %v2223 = vpop.f32.mrf.mxu0
      %v2224 = vadd.f32 %v2085, %v2223
      %v2225 = vpop.f32.mrf.mxu0
      %2226 = vmatprep.mubr.f32.mxu0 %v1629
      %2227 = vmatmul.mubr.f32.gmra.mxu0 %v1822
      %v2228 = vpop.f32.mrf.mxu0
      %v2229 = vadd.f32 %v2085, %v2228
      %v2230 = vpop.f32.mrf.mxu0
      %2231 = vmatprep.mubr.f32.mxu0 %v1630
      %2232 = vmatmul.mubr.f32.gmra.mxu0 %v1823
      %v2233 = vpop.f32.mrf.mxu0
      %v2234 = vadd.f32 %v2085, %v2233
      %v2235 = vpop.f32.mrf.mxu0
      %2236 = vmatprep.mubr.f32.mxu0 %v1631
      %2237 = vmatmul.mubr.f32.gmra.mxu0 %v1824
      %v2238 = vpop.f32.mrf.mxu0
      %v2239 = vadd.f32 %v2085, %v2238
      %v2240 = vpop.f32.mrf.mxu0
      %2241 = vmatprep.mubr.f32.mxu0 %v1632
      %2242 = vmatmul.mubr.f32.gmra.mxu0 %v1825
      %v2243 = vpop.f32.mrf.mxu0
      %v2244 = vadd.f32 %v2085, %v2243
      %v2245 = vpop.f32.mrf.mxu0
      %2246 = vmatprep.mubr.f32.mxu0 %v1633
      %2247 = vmatmul.mubr.f32.gmra.mxu0 %v1826
      %v2248 = vpop.f32.mrf.mxu0
      %v2249 = vadd.f32 %v2085, %v2248
      %v2250 = vpop.f32.mrf.mxu0
      %2251 = vmatprep.mubr.f32.mxu0 %v1634
      %2252 = vmatmul.mubr.f32.gmra.mxu0 %v1827
      %v2253 = vpop.f32.mrf.mxu0
      %v2254 = vadd.f32 %v2085, %v2253
      %v2255 = vpop.f32.mrf.mxu0
      %2256 = vmatprep.mubr.f32.mxu0 %v1635
      %2257 = vmatmul.mubr.f32.gmra.mxu0 %v1828
      %v2258 = vpop.f32.mrf.mxu0
      %v2259 = vadd.f32 %v2085, %v2258
      %v2260 = vpop.f32.mrf.mxu0
      %2261 = vmatprep.mubr.f32.mxu0 %v1636
      %2262 = vmatmul.mubr.f32.gmra.mxu0 %v1829
      %v2263 = vpop.f32.mrf.mxu0
      %v2264 = vadd.f32 %v2085, %v2263
      %v2265 = vpop.f32.mrf.mxu0
      %2266 = vmatprep.mubr.f32.mxu0 %v1637
      %2267 = vmatmul.mubr.f32.gmra.mxu0 %v1830
      %v2268 = vpop.f32.mrf.mxu0
      %v2269 = vadd.f32 %v2085, %v2268
      %v2270 = vpop.f32.mrf.mxu0
      %2271 = vmatprep.mubr.f32.mxu0 %v1638
      %2272 = vmatmul.mubr.f32.gmra.mxu0 %v1831
      %v2273 = vpop.f32.mrf.mxu0
      %v2274 = vadd.f32 %v2085, %v2273
      %v2275 = vpop.f32.mrf.mxu0
      %2276 = vmatprep.mubr.f32.mxu0 %v1639
      %2277 = vmatmul.mubr.f32.gmra.mxu0 %v1832
      %v2278 = vpop.f32.mrf.mxu0
      %v2279 = vadd.f32 %v2085, %v2278
      %v2280 = vpop.f32.mrf.mxu0
      %2281 = vmatprep.mubr.f32.mxu0 %v1640
      %2282 = vmatmul.mubr.f32.gmra.mxu0 %v1833
      %v2283 = vpop.f32.mrf.mxu0
      %v2284 = vadd.f32 %v2085, %v2283
      %v2285 = vpop.f32.mrf.mxu0
      %2286 = vmatprep.mubr.f32.mxu0 %v1641
      %2287 = vmatmul.mubr.f32.gmra.mxu0 %v1834
      %v2288 = vpop.f32.mrf.mxu0
      %v2289 = vadd.f32 %v2085, %v2288
      %v2290 = vpop.f32.mrf.mxu0
      %2291 = vmatprep.mubr.f32.mxu0 %v1642
      %2292 = vmatmul.mubr.f32.gmra.mxu0 %v1835
      %v2293 = vpop.f32.mrf.mxu0
      %v2294 = vadd.f32 %v2085, %v2293
      %v2295 = vpop.f32.mrf.mxu0
      %2296 = vmatprep.mubr.f32.mxu0 %v1643
      %2297 = vmatmul.mubr.f32.gmra.mxu0 %v1836
      %v2298 = vpop.f32.mrf.mxu0
      %v2299 = vadd.f32 %v2085, %v2298
      %v2300 = vpop.f32.mrf.mxu0
      %2301 = vmatprep.mubr.f32.mxu0 %v1644
      %2302 = vmatmul.mubr.f32.gmra.mxu0 %v1837
      %v2303 = vpop.f32.mrf.mxu0
      %v2304 = vadd.f32 %v2085, %v2303
      %v2305 = vpop.f32.mrf.mxu0
      %2306 = vmatprep.mubr.f32.mxu0 %v1645
      %2307 = vmatmul.mubr.f32.gmra.mxu0 %v1838
      %v2308 = vpop.f32.mrf.mxu0
      %v2309 = vadd.f32 %v2085, %v2308
      %v2310 = vpop.f32.mrf.mxu0
      %2311 = vdwg.mxu0
      %2312 = vmatprep.subr.mxu0 0.0
      %2313 = vmatpush1.msra.mxu0 %v2079
      %2314 = vmatprep.subr.mxu0 0.0
      %2315 = vmatpush1.msra.mxu0 %v2078
      %2316 = vmatprep.subr.mxu0 0.0
      %2317 = vmatpush1.msra.mxu0 %v2077
      %2318 = vmatprep.subr.mxu0 0.0
      %2319 = vmatpush1.msra.mxu0 %v2076
      %2320 = vmatprep.subr.mxu0 0.0
      %2321 = vmatpush1.msra.mxu0 %v2075
      %2322 = vmatprep.subr.mxu0 0.0
      %2323 = vmatpush1.msra.mxu0 %v2074
      %2324 = vmatprep.subr.mxu0 0.0
      %2325 = vmatpush1.msra.mxu0 %v2073
      %2326 = vmatprep.subr.mxu0 0.0
      %2327 = vmatpush1.msra.mxu0 %v2072
      %2328 = vmatprep.subr.mxu0 0.0
      %2329 = vmatpush1.msra.mxu0 %v2071
      %2330 = vmatprep.subr.mxu0 0.0
      %2331 = vmatpush1.msra.mxu0 %v2070
      %2332 = vmatprep.subr.mxu0 0.0
      %2333 = vmatpush1.msra.mxu0 %v2069
      %2334 = vmatprep.subr.mxu0 0.0
      %2335 = vmatpush1.msra.mxu0 %v2068
      %2336 = vmatprep.subr.mxu0 0.0
      %2337 = vmatpush1.msra.mxu0 %v2067
      %2338 = vmatprep.subr.mxu0 0.0
      %2339 = vmatpush1.msra.mxu0 %v2066
      %2340 = vmatprep.subr.mxu0 0.0
      %2341 = vmatpush1.msra.mxu0 %v2065
      %2342 = vmatprep.subr.mxu0 0.0
      %2343 = vmatpush1.msra.mxu0 %v2064
      %2344 = vmatprep.subr.mxu0 0.0
      %2345 = vmatpush2.msra.mxu0 0.0
      %2346 = vmatprep.subr.mxu0 0.0
      %2347 = vmatpush2.msra.mxu0 0.0
      %2348 = vmatprep.subr.mxu0 0.0
      %2349 = vmatpush2.msra.mxu0 0.0
      %2350 = vmatprep.subr.mxu0 0.0
      %2351 = vmatpush2.msra.mxu0 0.0
      %2352 = vmatprep.subr.mxu0 0.0
      %2353 = vmatpush2.msra.mxu0 0.0
      %2354 = vmatprep.subr.mxu0 0.0
      %2355 = vmatpush2.msra.mxu0 0.0
      %2356 = vmatprep.subr.mxu0 0.0
      %2357 = vmatpush2.msra.mxu0 0.0
      %2358 = vmatprep.subr.mxu0 0.0
      %2359 = vmatpush2.msra.mxu0 0.0
      %2360 = vmatprep.subr.mxu0 0.0
      %2361 = vmatpush2.msra.mxu0 0.0
      %2362 = vmatprep.subr.mxu0 0.0
      %2363 = vmatpush2.msra.mxu0 0.0
      %2364 = vmatprep.subr.mxu0 0.0
      %2365 = vmatpush2.msra.mxu0 0.0
      %2366 = vmatprep.subr.mxu0 0.0
      %2367 = vmatpush2.msra.mxu0 0.0
      %2368 = vmatprep.subr.mxu0 0.0
      %2369 = vmatpush2.msra.mxu0 0.0
      %2370 = vmatprep.subr.mxu0 0.0
      %2371 = vmatpush2.msra.mxu0 0.0
      %2372 = vmatprep.subr.mxu0 0.0
      %2373 = vmatpush2.msra.mxu0 0.0
      %2374 = vmatprep.subr.mxu0 0.0
      %2375 = vmatpush2.msra.mxu0 0.0
      %2376 = vmatprep.mubr.f32.mxu0 0.0
      %2377 = vmatmul.mubr.f32.gmra.mxu0 %v2000
      %v2378 = vpop.f32.mrf.mxu0
      %v2379 = vadd.f32 %v2154, %v2378
      %v2380 = vpop.f32.mrf.mxu0
      %2381 = vmatprep.mubr.f32.mxu0 0.0
      %2382 = vmatmul.mubr.f32.gmra.mxu0 %v2001
      %v2383 = vpop.f32.mrf.mxu0
      %v2384 = vadd.f32 %v2159, %v2383
      %v2385 = vpop.f32.mrf.mxu0
      %2386 = vmatprep.mubr.f32.mxu0 0.0
      %2387 = vmatmul.mubr.f32.gmra.mxu0 %v2002
      %v2388 = vpop.f32.mrf.mxu0
      %v2389 = vadd.f32 %v2164, %v2388
      %v2390 = vpop.f32.mrf.mxu0
      %2391 = vmatprep.mubr.f32.mxu0 0.0
      %2392 = vmatmul.mubr.f32.gmra.mxu0 %v2003
      %v2393 = vpop.f32.mrf.mxu0
      %v2394 = vadd.f32 %v2169, %v2393
      %v2395 = vpop.f32.mrf.mxu0
      %2396 = vmatprep.mubr.f32.mxu0 0.0
      %2397 = vmatmul.mubr.f32.gmra.mxu0 %v2004
      %v2398 = vpop.f32.mrf.mxu0
      %v2399 = vadd.f32 %v2174, %v2398
      %v2400 = vpop.f32.mrf.mxu0
      %2401 = vmatprep.mubr.f32.mxu0 0.0
      %2402 = vmatmul.mubr.f32.gmra.mxu0 %v2005
      %v2403 = vpop.f32.mrf.mxu0
      %v2404 = vadd.f32 %v2179, %v2403
      %v2405 = vpop.f32.mrf.mxu0
      %2406 = vmatprep.mubr.f32.mxu0 0.0
      %2407 = vmatmul.mubr.f32.gmra.mxu0 %v2006
      %v2408 = vpop.f32.mrf.mxu0
      %v2409 = vadd.f32 %v2184, %v2408
      %v2410 = vpop.f32.mrf.mxu0
      %2411 = vmatprep.mubr.f32.mxu0 0.0
      %2412 = vmatmul.mubr.f32.gmra.mxu0 %v2007
      %v2413 = vpop.f32.mrf.mxu0
      %v2414 = vadd.f32 %v2189, %v2413
      %v2415 = vpop.f32.mrf.mxu0
      %2416 = vmatprep.mubr.f32.mxu0 0.0
      %2417 = vmatmul.mubr.f32.gmra.mxu0 %v2008
      %v2418 = vpop.f32.mrf.mxu0
      %v2419 = vadd.f32 %v2194, %v2418
      %v2420 = vpop.f32.mrf.mxu0
      %2421 = vmatprep.mubr.f32.mxu0 0.0
      %2422 = vmatmul.mubr.f32.gmra.mxu0 %v2009
      %v2423 = vpop.f32.mrf.mxu0
      %v2424 = vadd.f32 %v2199, %v2423
      %v2425 = vpop.f32.mrf.mxu0
      %2426 = vmatprep.mubr.f32.mxu0 0.0
      %2427 = vmatmul.mubr.f32.gmra.mxu0 %v2010
      %v2428 = vpop.f32.mrf.mxu0
      %v2429 = vadd.f32 %v2204, %v2428
      %v2430 = vpop.f32.mrf.mxu0
      %2431 = vmatprep.mubr.f32.mxu0 0.0
      %2432 = vmatmul.mubr.f32.gmra.mxu0 %v2011
      %v2433 = vpop.f32.mrf.mxu0
      %v2434 = vadd.f32 %v2209, %v2433
      %v2435 = vpop.f32.mrf.mxu0
      %2436 = vmatprep.mubr.f32.mxu0 0.0
      %2437 = vmatmul.mubr.f32.gmra.mxu0 %v2012
      %v2438 = vpop.f32.mrf.mxu0
      %v2439 = vadd.f32 %v2214, %v2438
      %v2440 = vpop.f32.mrf.mxu0
      %2441 = vmatprep.mubr.f32.mxu0 0.0
      %2442 = vmatmul.mubr.f32.gmra.mxu0 %v2013
      %v2443 = vpop.f32.mrf.mxu0
      %v2444 = vadd.f32 %v2219, %v2443
      %v2445 = vpop.f32.mrf.mxu0
      %2446 = vmatprep.mubr.f32.mxu0 0.0
      %2447 = vmatmul.mubr.f32.gmra.mxu0 %v2014
      %v2448 = vpop.f32.mrf.mxu0
      %v2449 = vadd.f32 %v2224, %v2448
      %v2450 = vpop.f32.mrf.mxu0
      %2451 = vmatprep.mubr.f32.mxu0 0.0
      %2452 = vmatmul.mubr.f32.gmra.mxu0 %v2015
      %v2453 = vpop.f32.mrf.mxu0
      %v2454 = vadd.f32 %v2229, %v2453
      %v2455 = vpop.f32.mrf.mxu0
      %2456 = vmatprep.mubr.f32.mxu0 0.0
      %2457 = vmatmul.mubr.f32.gmra.mxu0 %v2016
      %v2458 = vpop.f32.mrf.mxu0
      %v2459 = vadd.f32 %v2234, %v2458
      %v2460 = vpop.f32.mrf.mxu0
      %2461 = vmatprep.mubr.f32.mxu0 0.0
      %2462 = vmatmul.mubr.f32.gmra.mxu0 %v2017
      %v2463 = vpop.f32.mrf.mxu0
      %v2464 = vadd.f32 %v2239, %v2463
      %v2465 = vpop.f32.mrf.mxu0
      %2466 = vmatprep.mubr.f32.mxu0 0.0
      %2467 = vmatmul.mubr.f32.gmra.mxu0 %v2018
      %v2468 = vpop.f32.mrf.mxu0
      %v2469 = vadd.f32 %v2244, %v2468
      %v2470 = vpop.f32.mrf.mxu0
      %2471 = vmatprep.mubr.f32.mxu0 0.0
      %2472 = vmatmul.mubr.f32.gmra.mxu0 %v2019
      %v2473 = vpop.f32.mrf.mxu0
      %v2474 = vadd.f32 %v2249, %v2473
      %v2475 = vpop.f32.mrf.mxu0
      %2476 = vmatprep.mubr.f32.mxu0 0.0
      %2477 = vmatmul.mubr.f32.gmra.mxu0 %v2020
      %v2478 = vpop.f32.mrf.mxu0
      %v2479 = vadd.f32 %v2254, %v2478
      %v2480 = vpop.f32.mrf.mxu0
      %2481 = vmatprep.mubr.f32.mxu0 0.0
      %2482 = vmatmul.mubr.f32.gmra.mxu0 %v2021
      %v2483 = vpop.f32.mrf.mxu0
      %v2484 = vadd.f32 %v2259, %v2483
      %v2485 = vpop.f32.mrf.mxu0
      %2486 = vmatprep.mubr.f32.mxu0 0.0
      %2487 = vmatmul.mubr.f32.gmra.mxu0 %v2022
      %v2488 = vpop.f32.mrf.mxu0
      %v2489 = vadd.f32 %v2264, %v2488
      %v2490 = vpop.f32.mrf.mxu0
      %2491 = vmatprep.mubr.f32.mxu0 0.0
      %2492 = vmatmul.mubr.f32.gmra.mxu0 %v2023
      %v2493 = vpop.f32.mrf.mxu0
      %v2494 = vadd.f32 %v2269, %v2493
      %v2495 = vpop.f32.mrf.mxu0
      %2496 = vmatprep.mubr.f32.mxu0 0.0
      %2497 = vmatmul.mubr.f32.gmra.mxu0 %v2024
      %v2498 = vpop.f32.mrf.mxu0
      %v2499 = vadd.f32 %v2274, %v2498
      %v2500 = vpop.f32.mrf.mxu0
      %2501 = vmatprep.mubr.f32.mxu0 0.0
      %2502 = vmatmul.mubr.f32.gmra.mxu0 %v2025
      %v2503 = vpop.f32.mrf.mxu0
      %v2504 = vadd.f32 %v2279, %v2503
      %v2505 = vpop.f32.mrf.mxu0
      %2506 = vmatprep.mubr.f32.mxu0 0.0
      %2507 = vmatmul.mubr.f32.gmra.mxu0 %v2026
      %v2508 = vpop.f32.mrf.mxu0
      %v2509 = vadd.f32 %v2284, %v2508
      %v2510 = vpop.f32.mrf.mxu0
      %2511 = vmatprep.mubr.f32.mxu0 0.0
      %2512 = vmatmul.mubr.f32.gmra.mxu0 %v2027
      %v2513 = vpop.f32.mrf.mxu0
      %v2514 = vadd.f32 %v2289, %v2513
      %v2515 = vpop.f32.mrf.mxu0
      %2516 = vmatprep.mubr.f32.mxu0 0.0
      %2517 = vmatmul.mubr.f32.gmra.mxu0 %v2028
      %v2518 = vpop.f32.mrf.mxu0
      %v2519 = vadd.f32 %v2294, %v2518
      %v2520 = vpop.f32.mrf.mxu0
      %2521 = vmatprep.mubr.f32.mxu0 0.0
      %2522 = vmatmul.mubr.f32.gmra.mxu0 %v2029
      %v2523 = vpop.f32.mrf.mxu0
      %v2524 = vadd.f32 %v2299, %v2523
      %v2525 = vpop.f32.mrf.mxu0
      %2526 = vmatprep.mubr.f32.mxu0 0.0
      %2527 = vmatmul.mubr.f32.gmra.mxu0 %v2030
      %v2528 = vpop.f32.mrf.mxu0
      %v2529 = vadd.f32 %v2304, %v2528
      %v2530 = vpop.f32.mrf.mxu0
      %2531 = vmatprep.mubr.f32.mxu0 0.0
      %2532 = vmatmul.mubr.f32.gmra.mxu0 %v2031
      %v2533 = vpop.f32.mrf.mxu0
      %v2534 = vadd.f32 %v2309, %v2533
      %v2535 = vpop.f32.mrf.mxu0
      %2536 = vdwg.mxu0
      %v2537 = vmax.f32 %v2379, 0.0
      %v2538 = vmax.f32 %v2384, 0.0
      %v2539 = vmax.f32 %v2389, 0.0
      %v2540 = vmax.f32 %v2394, 0.0
      %v2541 = vmax.f32 %v2399, 0.0
      %v2542 = vmax.f32 %v2404, 0.0
      %v2543 = vmax.f32 %v2409, 0.0
      %v2544 = vmax.f32 %v2414, 0.0
      %v2545 = vmax.f32 %v2419, 0.0
      %v2546 = vmax.f32 %v2424, 0.0
      %v2547 = vmax.f32 %v2429, 0.0
      %v2548 = vmax.f32 %v2434, 0.0
      %v2549 = vmax.f32 %v2439, 0.0
      %v2550 = vmax.f32 %v2444, 0.0
      %v2551 = vmax.f32 %v2449, 0.0
      %v2552 = vmax.f32 %v2454, 0.0
      %v2553 = vmax.f32 %v2459, 0.0
      %v2554 = vmax.f32 %v2464, 0.0
      %v2555 = vmax.f32 %v2469, 0.0
      %v2556 = vmax.f32 %v2474, 0.0
      %v2557 = vmax.f32 %v2479, 0.0
      %v2558 = vmax.f32 %v2484, 0.0
      %v2559 = vmax.f32 %v2489, 0.0
      %v2560 = vmax.f32 %v2494, 0.0
      %v2561 = vmax.f32 %v2499, 0.0
      %v2562 = vmax.f32 %v2504, 0.0
      %v2563 = vmax.f32 %v2509, 0.0
      %v2564 = vmax.f32 %v2514, 0.0
      %v2565 = vmax.f32 %v2519, 0.0
      %v2566 = vmax.f32 %v2524, 0.0
      %v2567 = vmax.f32 %v2529, 0.0
      %v2568 = vmax.f32 %v2534, 0.0
      %v2569 = vld [vmem:[%s5] sm:$0xff]
      %v2570 = vld [vmem:[%s5 + $0x8] sm:$0xff]
      %v2571 = vmul.f32 %v2537, %v2569
      %v2572 = vmul.f32 %v2538, %v2570
      %v2573 = vmul.f32 %v2539, %v2569
      %v2574 = vmul.f32 %v2540, %v2570
      %v2575 = vmul.f32 %v2541, %v2569
      %v2576 = vmul.f32 %v2542, %v2570
      %v2577 = vmul.f32 %v2543, %v2569
      %v2578 = vmul.f32 %v2544, %v2570
      %v2579 = vmul.f32 %v2545, %v2569
      %v2580 = vmul.f32 %v2546, %v2570
      %v2581 = vmul.f32 %v2547, %v2569
      %v2582 = vmul.f32 %v2548, %v2570
      %v2583 = vmul.f32 %v2549, %v2569
      %v2584 = vmul.f32 %v2550, %v2570
      %v2585 = vmul.f32 %v2551, %v2569
      %v2586 = vmul.f32 %v2552, %v2570
      %v2587 = vmul.f32 %v2553, %v2569
      %v2588 = vmul.f32 %v2554, %v2570
      %v2589 = vmul.f32 %v2555, %v2569
      %v2590 = vmul.f32 %v2556, %v2570
      %v2591 = vmul.f32 %v2557, %v2569
      %v2592 = vmul.f32 %v2558, %v2570
      %v2593 = vmul.f32 %v2559, %v2569
      %v2594 = vmul.f32 %v2560, %v2570
      %v2595 = vmul.f32 %v2561, %v2569
      %v2596 = vmul.f32 %v2562, %v2570
      %v2597 = vmul.f32 %v2563, %v2569
      %v2598 = vmul.f32 %v2564, %v2570
      %v2599 = vmul.f32 %v2565, %v2569
      %v2600 = vmul.f32 %v2566, %v2570
      %v2601 = vmul.f32 %v2567, %v2569
      %v2602 = vmul.f32 %v2568, %v2570
      %2603 = vadd.xlane.f32.xlu0 %v2571
      %v2604 = vpop.xlane.xlu0 %2603
      %2605 = vadd.xlane.f32.xlu0 %v2572
      %v2606 = vpop.xlane.xlu0 %2605
      %2607 = vadd.xlane.f32.xlu0 %v2573
      %v2608 = vpop.xlane.xlu0 %2607
      %2609 = vadd.xlane.f32.xlu0 %v2574
      %v2610 = vpop.xlane.xlu0 %2609
      %2611 = vadd.xlane.f32.xlu0 %v2575
      %v2612 = vpop.xlane.xlu0 %2611
      %2613 = vadd.xlane.f32.xlu0 %v2576
      %v2614 = vpop.xlane.xlu0 %2613
      %2615 = vadd.xlane.f32.xlu0 %v2577
      %v2616 = vpop.xlane.xlu0 %2615
      %2617 = vadd.xlane.f32.xlu0 %v2578
      %v2618 = vpop.xlane.xlu0 %2617
      %2619 = vadd.xlane.f32.xlu0 %v2579
      %v2620 = vpop.xlane.xlu0 %2619
      %2621 = vadd.xlane.f32.xlu0 %v2580
      %v2622 = vpop.xlane.xlu0 %2621
      %2623 = vadd.xlane.f32.xlu0 %v2581
      %v2624 = vpop.xlane.xlu0 %2623
      %2625 = vadd.xlane.f32.xlu0 %v2582
      %v2626 = vpop.xlane.xlu0 %2625
      %2627 = vadd.xlane.f32.xlu0 %v2583
      %v2628 = vpop.xlane.xlu0 %2627
      %2629 = vadd.xlane.f32.xlu0 %v2584
      %v2630 = vpop.xlane.xlu0 %2629
      %2631 = vadd.xlane.f32.xlu0 %v2585
      %v2632 = vpop.xlane.xlu0 %2631
      %2633 = vadd.xlane.f32.xlu0 %v2586
      %v2634 = vpop.xlane.xlu0 %2633
      %2635 = vadd.xlane.f32.xlu0 %v2587
      %v2636 = vpop.xlane.xlu0 %2635
      %2637 = vadd.xlane.f32.xlu0 %v2588
      %v2638 = vpop.xlane.xlu0 %2637
      %2639 = vadd.xlane.f32.xlu0 %v2589
      %v2640 = vpop.xlane.xlu0 %2639
      %2641 = vadd.xlane.f32.xlu0 %v2590
      %v2642 = vpop.xlane.xlu0 %2641
      %2643 = vadd.xlane.f32.xlu0 %v2591
      %v2644 = vpop.xlane.xlu0 %2643
      %2645 = vadd.xlane.f32.xlu0 %v2592
      %v2646 = vpop.xlane.xlu0 %2645
      %2647 = vadd.xlane.f32.xlu0 %v2593
      %v2648 = vpop.xlane.xlu0 %2647
      %2649 = vadd.xlane.f32.xlu0 %v2594
      %v2650 = vpop.xlane.xlu0 %2649
      %2651 = vadd.xlane.f32.xlu0 %v2595
      %v2652 = vpop.xlane.xlu0 %2651
      %2653 = vadd.xlane.f32.xlu0 %v2596
      %v2654 = vpop.xlane.xlu0 %2653
      %2655 = vadd.xlane.f32.xlu0 %v2597
      %v2656 = vpop.xlane.xlu0 %2655
      %2657 = vadd.xlane.f32.xlu0 %v2598
      %v2658 = vpop.xlane.xlu0 %2657
      %2659 = vadd.xlane.f32.xlu0 %v2599
      %v2660 = vpop.xlane.xlu0 %2659
      %2661 = vadd.xlane.f32.xlu0 %v2600
      %v2662 = vpop.xlane.xlu0 %2661
      %2663 = vadd.xlane.f32.xlu0 %v2601
      %v2664 = vpop.xlane.xlu0 %2663
      %2665 = vadd.xlane.f32.xlu0 %v2602
      %v2666 = vpop.xlane.xlu0 %2665
      %v2667 = vadd.f32 %v2604, %v2606
      %v2668 = vrot.slane %v2667, 4
      %v2669 = vadd.f32 %v2667, %v2668
      %v2670 = vrot.slane %v2669, 2
      %v2671 = vadd.f32 %v2669, %v2670
      %v2672 = vrot.slane %v2671, 1
      %v2673 = vadd.f32 %v2671, %v2672
      %v2674 = vadd.f32 %v2608, %v2610
      %v2675 = vrot.slane %v2674, 4
      %v2676 = vadd.f32 %v2674, %v2675
      %v2677 = vrot.slane %v2676, 2
      %v2678 = vadd.f32 %v2676, %v2677
      %v2679 = vrot.slane %v2678, 1
      %v2680 = vadd.f32 %v2678, %v2679
      %v2681 = vadd.f32 %v2612, %v2614
      %v2682 = vrot.slane %v2681, 4
      %v2683 = vadd.f32 %v2681, %v2682
      %v2684 = vrot.slane %v2683, 2
      %v2685 = vadd.f32 %v2683, %v2684
      %v2686 = vrot.slane %v2685, 1
      %v2687 = vadd.f32 %v2685, %v2686
      %v2688 = vadd.f32 %v2616, %v2618
      %v2689 = vrot.slane %v2688, 4
      %v2690 = vadd.f32 %v2688, %v2689
      %v2691 = vrot.slane %v2690, 2
      %v2692 = vadd.f32 %v2690, %v2691
      %v2693 = vrot.slane %v2692, 1
      %v2694 = vadd.f32 %v2692, %v2693
      %v2695 = vadd.f32 %v2620, %v2622
      %v2696 = vrot.slane %v2695, 4
      %v2697 = vadd.f32 %v2695, %v2696
      %v2698 = vrot.slane %v2697, 2
      %v2699 = vadd.f32 %v2697, %v2698
      %v2700 = vrot.slane %v2699, 1
      %v2701 = vadd.f32 %v2699, %v2700
      %v2702 = vadd.f32 %v2624, %v2626
      %v2703 = vrot.slane %v2702, 4
      %v2704 = vadd.f32 %v2702, %v2703
      %v2705 = vrot.slane %v2704, 2
      %v2706 = vadd.f32 %v2704, %v2705
      %v2707 = vrot.slane %v2706, 1
      %v2708 = vadd.f32 %v2706, %v2707
      %v2709 = vadd.f32 %v2628, %v2630
      %v2710 = vrot.slane %v2709, 4
      %v2711 = vadd.f32 %v2709, %v2710
      %v2712 = vrot.slane %v2711, 2
      %v2713 = vadd.f32 %v2711, %v2712
      %v2714 = vrot.slane %v2713, 1
      %v2715 = vadd.f32 %v2713, %v2714
      %v2716 = vadd.f32 %v2632, %v2634
      %v2717 = vrot.slane %v2716, 4
      %v2718 = vadd.f32 %v2716, %v2717
      %v2719 = vrot.slane %v2718, 2
      %v2720 = vadd.f32 %v2718, %v2719
      %v2721 = vrot.slane %v2720, 1
      %v2722 = vadd.f32 %v2720, %v2721
      %v2723 = vadd.f32 %v2636, %v2638
      %v2724 = vrot.slane %v2723, 4
      %v2725 = vadd.f32 %v2723, %v2724
      %v2726 = vrot.slane %v2725, 2
      %v2727 = vadd.f32 %v2725, %v2726
      %v2728 = vrot.slane %v2727, 1
      %v2729 = vadd.f32 %v2727, %v2728
      %v2730 = vadd.f32 %v2640, %v2642
      %v2731 = vrot.slane %v2730, 4
      %v2732 = vadd.f32 %v2730, %v2731
      %v2733 = vrot.slane %v2732, 2
      %v2734 = vadd.f32 %v2732, %v2733
      %v2735 = vrot.slane %v2734, 1
      %v2736 = vadd.f32 %v2734, %v2735
      %v2737 = vadd.f32 %v2644, %v2646
      %v2738 = vrot.slane %v2737, 4
      %v2739 = vadd.f32 %v2737, %v2738
      %v2740 = vrot.slane %v2739, 2
      %v2741 = vadd.f32 %v2739, %v2740
      %v2742 = vrot.slane %v2741, 1
      %v2743 = vadd.f32 %v2741, %v2742
      %v2744 = vadd.f32 %v2648, %v2650
      %v2745 = vrot.slane %v2744, 4
      %v2746 = vadd.f32 %v2744, %v2745
      %v2747 = vrot.slane %v2746, 2
      %v2748 = vadd.f32 %v2746, %v2747
      %v2749 = vrot.slane %v2748, 1
      %v2750 = vadd.f32 %v2748, %v2749
      %v2751 = vadd.f32 %v2652, %v2654
      %v2752 = vrot.slane %v2751, 4
      %v2753 = vadd.f32 %v2751, %v2752
      %v2754 = vrot.slane %v2753, 2
      %v2755 = vadd.f32 %v2753, %v2754
      %v2756 = vrot.slane %v2755, 1
      %v2757 = vadd.f32 %v2755, %v2756
      %v2758 = vadd.f32 %v2656, %v2658
      %v2759 = vrot.slane %v2758, 4
      %v2760 = vadd.f32 %v2758, %v2759
      %v2761 = vrot.slane %v2760, 2
      %v2762 = vadd.f32 %v2760, %v2761
      %v2763 = vrot.slane %v2762, 1
      %v2764 = vadd.f32 %v2762, %v2763
      %v2765 = vadd.f32 %v2660, %v2662
      %v2766 = vrot.slane %v2765, 4
      %v2767 = vadd.f32 %v2765, %v2766
      %v2768 = vrot.slane %v2767, 2
      %v2769 = vadd.f32 %v2767, %v2768
      %v2770 = vrot.slane %v2769, 1
      %v2771 = vadd.f32 %v2769, %v2770
      %v2772 = vadd.f32 %v2664, %v2666
      %v2773 = vrot.slane %v2772, 4
      %v2774 = vadd.f32 %v2772, %v2773
      %v2775 = vrot.slane %v2774, 2
      %v2776 = vadd.f32 %v2774, %v2775
      %v2777 = vrot.slane %v2776, 1
      %v2778 = vadd.f32 %v2776, %v2777
      %v2779 = vld [vmem:[#allocation2] sm:$0x1]
      %v2780 = vadd.f32 %v2673, %v2779
      %v2781 = vadd.f32 %v2680, %v2779
      %v2782 = vadd.f32 %v2687, %v2779
      %v2783 = vadd.f32 %v2694, %v2779
      %v2784 = vadd.f32 %v2701, %v2779
      %v2785 = vadd.f32 %v2708, %v2779
      %v2786 = vadd.f32 %v2715, %v2779
      %v2787 = vadd.f32 %v2722, %v2779
      %v2788 = vadd.f32 %v2729, %v2779
      %v2789 = vadd.f32 %v2736, %v2779
      %v2790 = vadd.f32 %v2743, %v2779
      %v2791 = vadd.f32 %v2750, %v2779
      %v2792 = vadd.f32 %v2757, %v2779
      %v2793 = vadd.f32 %v2764, %v2779
      %v2794 = vadd.f32 %v2771, %v2779
      %v2795 = vadd.f32 %v2778, %v2779
      %vm2796 = vcmask 0
      %2797 = vst.msk [vmem:[%s280] sm:$0x1] %vm2796, %v2780
      %2798 = vst.msk [vmem:[%s280 + $0x1] sm:$0x1] %vm2796, %v2781
      %2799 = vst.msk [vmem:[%s280 + $0x2] sm:$0x1] %vm2796, %v2782
      %2800 = vst.msk [vmem:[%s280 + $0x3] sm:$0x1] %vm2796, %v2783
      %2801 = vst.msk [vmem:[%s280 + $0x4] sm:$0x1] %vm2796, %v2784
      %2802 = vst.msk [vmem:[%s280 + $0x5] sm:$0x1] %vm2796, %v2785
      %2803 = vst.msk [vmem:[%s280 + $0x6] sm:$0x1] %vm2796, %v2786
      %2804 = vst.msk [vmem:[%s280 + $0x7] sm:$0x1] %vm2796, %v2787
      %2805 = vst.msk [vmem:[%s280 + $0x8] sm:$0x1] %vm2796, %v2788
      %2806 = vst.msk [vmem:[%s280 + $0x9] sm:$0x1] %vm2796, %v2789
      %2807 = vst.msk [vmem:[%s280 + $0xa] sm:$0x1] %vm2796, %v2790
      %2808 = vst.msk [vmem:[%s280 + $0xb] sm:$0x1] %vm2796, %v2791
      %2809 = vst.msk [vmem:[%s280 + $0xc] sm:$0x1] %vm2796, %v2792
      %2810 = vst.msk [vmem:[%s280 + $0xd] sm:$0x1] %vm2796, %v2793
      %2811 = vst.msk [vmem:[%s280 + $0xe] sm:$0x1] %vm2796, %v2794
      %2812 = vst.msk [vmem:[%s280 + $0xf] sm:$0x1] %vm2796, %v2795
      %s2813 = smul.u32 16, %s20
      %p2814 = scmp.lt.s32.totalorder %s2813, 31
      %s2815 = scalar_select %p2814, %s2813, 31
      %s2816 = scalar_lea.vmem %s7, %s2815
      // Predicated region
      $region49: #{foam_predictor_forward.1} parent=47 // pred_check
        %p2817 = pneg %p190
      $region50: #{foam_predictor_forward.1} parent=47 // pred_check_branch
        %2819 = sbr.rel (%p2817) target = $region52
      $region51: #{foam_predictor_forward.1} parent=47 // pred_region
        %s2820 = smul.u32 16, %s20
      $region52: #{foam_predictor_forward.1} parent=47 // pred_fallthru
        _
    $region48: #{foam_predictor_forward.1} parent=5 // pred_fallthru
      _
    %p2821 = scmp.le.s32.totalorder 2, %s15
    // Predicated region
    $region53: #{foam_predictor_forward.1} parent=5 // pred_check
      %p2822 = pneg %p2821
    $region54: #{foam_predictor_forward.1} parent=5 // pred_check_branch
      %2824 = sbr.rel (%p2822) target = $region56
    $region55: #{foam_predictor_forward.1} parent=5 // pred_region
      %s2825 = ssub.s32 %s15, 2
      // Predicated region
      $region57: #{foam_predictor_forward.1} parent=55 // pred_check
        %p2826 = pneg %p196
      $region58: #{foam_predictor_forward.1} parent=55 // pred_check_branch
        %2828 = sbr.rel (%p2826) target = $region60
      $region59: #{foam_predictor_forward.1} parent=55 // pred_region
        %s2829 = smul.u32 16, %s21
        %p2830 = scmp.lt.s32.totalorder %s2829, 31
        %s2831 = scalar_select %p2830, %s2829, 31
        %s2832 = scalar_lea.vmem %s7, %s2831
      $region60: #{foam_predictor_forward.1} parent=55 // pred_fallthru
        _
    $region56: #{foam_predictor_forward.1} parent=5 // pred_fallthru
      _
  $region6: #{foam_predictor_forward.1} parent=0 // loop_footer
    %s19 = sadd.s32 1, %s15
  $region7: #{foam_predictor_forward.1} parent=0 // loop_footer_branch
    %14 = sbr.rel target = $region3
  $region8: #{foam_predictor_forward.1} parent=0 // loop_exit
    _

</llo_original>
